<compile_context>
chip_gen: v7x
topology: tpu7x:2x2x1
jax: 0.10.0
libtpu: 0.0.40
codegen_flags: <defaults>
</compile_context>

<pallas_src>
import numpy as np
import jax
import jax.numpy as jnp
from jax import lax
from jax.experimental import pallas as pl
from jax.experimental.pallas import tpu as pltpu

NQ = 25          # number of quantization bins (2 <= nq <= 100)
VMIN, VMAX = 0.0, 1.0


def _round_up(v, m):
    return ((v + m - 1) // m) * m


def _ap_kernel_factory(nq, nq_pad, a, vmin, n_tiles_m, n_pad_m, tile_n):
    """Builds the kernel body with all quantizer constants folded in as literals."""

    def kernel(x_ref, lab_ref, o_ref, nbs_acc, rec_acc):
        m = pl.program_id(1)

        @pl.when(m == 0)
        def _():
            nbs_acc[...] = jnp.zeros_like(nbs_acc)
            rec_acc[...] = jnp.zeros_like(rec_acc)

        xb = x_ref[...]            # (tile_n, tile_m) f32
        lb = lab_ref[...]          # (tile_n, tile_m) f32 in {0, 1}
        tile_m = xb.shape[-1]

        # Cumulative-bin offsets c_j = j + 2 - nq for real bins; zero-padded bins
        # (j >= nq) reuse the last real offset so they contribute exactly 0 later.
        bin_idx = lax.broadcasted_iota(jnp.int32, (nq_pad, tile_m), 0)
        c = jnp.minimum(bin_idx, nq - 1).astype(jnp.float32) + np.float32(2 - nq)

        # Cumulative quantized histogram: C_j(x) = clip(a*(x - vmin) + c_j, 0, 1).
        t = (xb - np.float32(vmin)) * np.float32(a)                  # (tile_n, tile_m)
        cq = jnp.clip(c[:, None, :] + t[None, :, :], 0.0, 1.0)       # (nq_pad, tile_n, tile_m)

        nbs_acc[...] += jnp.sum(cq, axis=-1)                         # cum_nbs partial
        rec_acc[...] += jnp.sum(cq * lb[None, :, :], axis=-1)        # cum_rec partial

        @pl.when(m == n_tiles_m - 1)
        def _():
            cum_nbs = nbs_acc[...]                                   # (nq_pad, tile_n)
            cum_rec = rec_acc[...]
            if n_pad_m:
                # Each vmin-padded database column adds exactly 1.0 to bins j >= nq-1.
                row_idx = lax.broadcasted_iota(jnp.int32, (nq_pad, tile_n), 0)
                cum_nbs = cum_nbs - jnp.where(row_idx >= nq - 1,
                                              np.float32(n_pad_m), np.float32(0.0))

            prec = cum_rec / (1e-16 + cum_nbs)                        # (nq_pad, tile_n)

            # Per-bin rec = adjacent differences of cum_rec (bidiagonal MXU matmul).
            r = lax.broadcasted_iota(jnp.int32, (nq_pad, nq_pad), 0)
            cc = lax.broadcasted_iota(jnp.int32, (nq_pad, nq_pad), 1)
            dmat = ((r == cc).astype(jnp.float32)
                    - (r == cc + 1).astype(jnp.float32))              # D[k,k]=1, D[k,k-1]=-1
            rec = jnp.dot(dmat, cum_rec, preferred_element_type=jnp.float32)

            total = cum_rec[nq_pad - 1:nq_pad, :]                     # (1, tile_n)
            ap = jnp.sum(prec * rec, axis=0, keepdims=True) / total   # (1, tile_n)
            o_ref[...] = ap

    return kernel


def ap_loss(x, label, qw=None, ret='1-mAP', nq=NQ, vmin=VMIN, vmax=VMAX,
            tile_n=128, tile_m=512):
    assert x.shape == label.shape
    assert isinstance(nq, int) and 2 <= nq <= 100
    N, M = x.shape
    gap = float(vmax) - float(vmin)
    assert gap > 0
    a = (nq - 1) / gap

    nq_pad = _round_up(nq, 8)
    tile_n = int(min(tile_n, _round_up(N, 8)))
    tile_m = int(min(tile_m, _round_up(M, 128)))
    Np = _round_up(N, tile_n)
    Mp = _round_up(M, tile_m)
    n_pad_m = Mp - M
    n_tiles_n = Np // tile_n
    n_tiles_m = Mp // tile_m

    xp = x.astype(jnp.float32)
    lp = label.astype(jnp.float32)
    if Np != N or Mp != M:
        xp = jnp.pad(xp, ((0, Np - N), (0, Mp - M)), constant_values=float(vmin))
        lp = jnp.pad(lp, ((0, Np - N), (0, Mp - M)), constant_values=0.0)

    kernel = _ap_kernel_factory(nq, nq_pad, a, float(vmin), n_tiles_m, n_pad_m, tile_n)

    ap_tiles = pl.pallas_call(
        kernel,
        out_shape=jax.ShapeDtypeStruct((n_tiles_n, tile_n), jnp.float32),
        grid_spec=pltpu.PrefetchScalarGridSpec(
            num_scalar_prefetch=0,
            grid=(n_tiles_n, n_tiles_m),
            in_specs=[
                pl.BlockSpec((tile_n, tile_m), lambda i, m: (i, m)),
                pl.BlockSpec((tile_n, tile_m), lambda i, m: (i, m)),
            ],
            out_specs=pl.BlockSpec((1, tile_n), lambda i, m: (i, 0)),
            scratch_shapes=[
                pltpu.VMEM((nq_pad, tile_n), jnp.float32),   # cum_nbs accumulator
                pltpu.VMEM((nq_pad, tile_n), jnp.float32),   # cum_rec accumulator
            ],
        ),
        compiler_params=pltpu.CompilerParams(
            dimension_semantics=("parallel", "arbitrary"),
            vmem_limit_bytes=32 * 1024 * 1024,
        ),
        cost_estimate=pl.CostEstimate(
            flops=6 * Np * nq_pad * Mp,
            transcendentals=0,
            bytes_accessed=4 * (2 * Np * Mp + n_tiles_n * tile_n),
        ),
    )(xp, lp)

    ap = ap_tiles.reshape(-1)[:N]        # drop padded rows (NaN there, sliced away)
    if ret == '1-mAP':
        if qw is not None:
            ap = ap * qw
        return 1.0 - jnp.mean(ap)
    elif ret == 'AP':
        assert qw is None
        return ap
    else:
        raise ValueError('Bad return type for APLoss(): %s' % str(ret))


def ap_loss_reference(x, label, nq=NQ, vmin=VMIN, vmax=VMAX):
    """Pure-numpy (float64) port of the PyTorch forward, used as ground truth."""
    x = np.asarray(x, np.float64)
    label = np.asarray(label, np.float64)
    gap = vmax - vmin
    a = (nq - 1) / gap
    w = np.empty((2 * nq,), np.float64)
    b = np.empty((2 * nq,), np.float64)
    w[:nq] = -a
    b[:nq] = a * vmin + np.arange(nq, 0, -1)
    w[nq:] = a
    b[nq:] = np.arange(2 - nq, 2, 1) - a * vmin
    w[0] = w[-1] = 0.0
    b[0] = b[-1] = 1.0
    q = x[:, None, :] * w[None, :, None] + b[None, :, None]   # (N, 2*nq, M)
    q = np.minimum(q[:, :nq], q[:, nq:]).clip(min=0)
    nbs = q.sum(-1)
    rec = (q * label[:, None, :]).sum(-1)
    prec = np.cumsum(rec, -1) / (1e-16 + np.cumsum(nbs, -1))
    rec = rec / rec.sum(-1, keepdims=True)
    ap = (prec * rec).sum(-1)
    return 1.0 - ap.mean()


if __name__ == "__main__":
    key = jax.random.PRNGKey(0)
    k1, k2, k3, k4 = jax.random.split(key, 4)

    # Test 1: tile-aligned shapes.
    N, M = 16, 128
    x = jax.random.uniform(k1, (N, M), dtype=jnp.float32, minval=VMIN, maxval=VMAX)
    label = (jax.random.uniform(k2, (N, M)) < 0.3).astype(jnp.float32)
    label = label.at[:, 0].set(1.0)   # guarantee >= 1 positive per row (as in torch usage)
    loss = jax.block_until_ready(ap_loss(x, label))
    ref = ap_loss_reference(np.asarray(x), np.asarray(label))
    np.testing.assert_allclose(np.asarray(loss), ref, rtol=1e-5, atol=1e-5)

    # Test 2: ragged shapes exercising the N- and M-padding paths.
    N2, M2 = 10, 200
    x2 = jax.random.uniform(k3, (N2, M2), dtype=jnp.float32, minval=VMIN, maxval=VMAX)
    label2 = (jax.random.uniform(k4, (N2, M2)) < 0.3).astype(jnp.float32)
    label2 = label2.at[:, 0].set(1.0)
    loss2 = jax.block_until_ready(ap_loss(x2, label2))
    ref2 = ap_loss_reference(np.asarray(x2), np.asarray(label2))
    np.testing.assert_allclose(np.asarray(loss2), ref2, rtol=1e-5, atol=1e-5)

    print("KERNEL_OK")
</pallas_src>

<mosaic_0001>
module attributes {stable_mosaic.version = 11 : i64} {
  func.func @kernel(%arg0: i32, %arg1: i32, %arg2: memref<16x128xf32, #tpu.memory_space<vmem>>, %arg3: memref<16x128xf32, #tpu.memory_space<vmem>>, %arg4: memref<1x16xf32, #tpu.memory_space<vmem>>, %arg5: memref<32x16xf32, #tpu.memory_space<vmem>>, %arg6: memref<32x16xf32, #tpu.memory_space<vmem>>) attributes {dimension_semantics = [#tpu.dimension_semantics<parallel>, #tpu.dimension_semantics<arbitrary>], iteration_bounds = array<i64: 1, 1>, scalar_prefetch = 0 : i64, scratch_operands = 2 : i64, tpu.core_type = #tpu.core_type<tc>, window_params = [{transform_indices = @transform_0, window_bounds = array<i64: 16, 128>}, {transform_indices = @transform_1, window_bounds = array<i64: 16, 128>}, {transform_indices = @transform_2, window_bounds = array<i64: 1, 16>}]} {
    %c0_i32 = arith.constant 0 : i32
    %0 = arith.cmpi eq, %arg1, %c0_i32 : i32
    %1 = arith.extui %0 : i1 to i32
    %c0_i32_0 = arith.constant 0 : i32
    %2 = arith.cmpi ne, %1, %c0_i32_0 : i32
    scf.if %2 {
      %cst_20 = arith.constant 0.000000e+00 : f32
      %38 = vector.broadcast %cst_20 : f32 to vector<32x16xf32>
      %c0_21 = arith.constant 0 : index
      %c0_22 = arith.constant 0 : index
      %39 = vector.load %arg5[%c0_21, %c0_22] : memref<32x16xf32, #tpu.memory_space<vmem>>, vector<32x16xf32>
      tpu.vector_store %arg5[%c0_21, %c0_22], %38 {strides = array<i32>} : memref<32x16xf32, #tpu.memory_space<vmem>>, vector<32x16xf32>,
      %cst_23 = arith.constant 0.000000e+00 : f32
      %40 = vector.broadcast %cst_23 : f32 to vector<32x16xf32>
      %c0_24 = arith.constant 0 : index
      %c0_25 = arith.constant 0 : index
      %41 = vector.load %arg6[%c0_24, %c0_25] : memref<32x16xf32, #tpu.memory_space<vmem>>, vector<32x16xf32>
      tpu.vector_store %arg6[%c0_24, %c0_25], %40 {strides = array<i32>} : memref<32x16xf32, #tpu.memory_space<vmem>>, vector<32x16xf32>,
    } else {
    }
    %c0 = arith.constant 0 : index
    %c0_1 = arith.constant 0 : index
    %3 = vector.load %arg2[%c0, %c0_1] : memref<16x128xf32, #tpu.memory_space<vmem>>, vector<16x128xf32>
    %c0_2 = arith.constant 0 : index
    %c0_3 = arith.constant 0 : index
    %4 = vector.load %arg3[%c0_2, %c0_3] : memref<16x128xf32, #tpu.memory_space<vmem>>, vector<16x128xf32>
    %5 = tpu.iota {dimensions = array<i32: 0>} : vector<32x128xi32>
    %c24_i32 = arith.constant 24 : i32
    %6 = vector.broadcast %c24_i32 : i32 to vector<32x128xi32>
    %7 = arith.minsi %5, %6 : vector<32x128xi32>
    %8 = arith.sitofp %7 : vector<32x128xi32> to vector<32x128xf32>
    %cst = arith.constant -2.300000e+01 : f32
    %9 = vector.broadcast %cst : f32 to vector<32x128xf32>
    %10 = arith.addf %8, %9 : vector<32x128xf32>
    %cst_4 = arith.constant 0.000000e+00 : f32
    %11 = vector.broadcast %cst_4 : f32 to vector<16x128xf32>
    %12 = arith.subf %3, %11 : vector<16x128xf32>
    %cst_5 = arith.constant 2.400000e+01 : f32
    %13 = vector.broadcast %cst_5 : f32 to vector<16x128xf32>
    %14 = arith.mulf %12, %13 : vector<16x128xf32>
    %15 = vector.shape_cast %10 : vector<32x128xf32> to vector<32x1x128xf32>
    %16 = vector.shape_cast %14 : vector<16x128xf32> to vector<1x16x128xf32>
    %17 = vector.broadcast %15 : vector<32x1x128xf32> to vector<32x16x128xf32>
    %18 = vector.broadcast %16 : vector<1x16x128xf32> to vector<32x16x128xf32>
    %19 = arith.addf %17, %18 : vector<32x16x128xf32>
    %cst_6 = arith.constant 0.000000e+00 : f32
    %cst_7 = arith.constant 1.000000e+00 : f32
    %20 = vector.broadcast %cst_6 : f32 to vector<32x16x128xf32>
    %21 = arith.maximumf %20, %19 : vector<32x16x128xf32>
    %22 = vector.broadcast %cst_7 : f32 to vector<32x16x128xf32>
    %23 = arith.minimumf %22, %21 : vector<32x16x128xf32>
    %c0_8 = arith.constant 0 : index
    %c0_9 = arith.constant 0 : index
    %24 = vector.load %arg5[%c0_8, %c0_9] : memref<32x16xf32, #tpu.memory_space<vmem>>, vector<32x16xf32>
    %cst_10 = arith.constant dense<0.000000e+00> : vector<32x16xf32>
    %25 = vector.multi_reduction <add>, %23, %cst_10 [2] : vector<32x16x128xf32> to vector<32x16xf32>
    %26 = arith.addf %24, %25 : vector<32x16xf32>
    %c0_11 = arith.constant 0 : index
    %c0_12 = arith.constant 0 : index
    %27 = vector.load %arg5[%c0_11, %c0_12] : memref<32x16xf32, #tpu.memory_space<vmem>>, vector<32x16xf32>
    tpu.vector_store %arg5[%c0_11, %c0_12], %26 {strides = array<i32>} : memref<32x16xf32, #tpu.memory_space<vmem>>, vector<32x16xf32>,
    %c0_13 = arith.constant 0 : index
    %c0_14 = arith.constant 0 : index
    %28 = vector.load %arg6[%c0_13, %c0_14] : memref<32x16xf32, #tpu.memory_space<vmem>>, vector<32x16xf32>
    %29 = vector.shape_cast %4 : vector<16x128xf32> to vector<1x16x128xf32>
    %30 = vector.broadcast %29 : vector<1x16x128xf32> to vector<32x16x128xf32>
    %31 = arith.mulf %23, %30 : vector<32x16x128xf32>
    %cst_15 = arith.constant dense<0.000000e+00> : vector<32x16xf32>
    %32 = vector.multi_reduction <add>, %31, %cst_15 [2] : vector<32x16x128xf32> to vector<32x16xf32>
    %33 = arith.addf %28, %32 : vector<32x16xf32>
    %c0_16 = arith.constant 0 : index
    %c0_17 = arith.constant 0 : index
    %34 = vector.load %arg6[%c0_16, %c0_17] : memref<32x16xf32, #tpu.memory_space<vmem>>, vector<32x16xf32>
    tpu.vector_store %arg6[%c0_16, %c0_17], %33 {strides = array<i32>} : memref<32x16xf32, #tpu.memory_space<vmem>>, vector<32x16xf32>,
    %c0_i32_18 = arith.constant 0 : i32
    %35 = arith.cmpi eq, %arg1, %c0_i32_18 : i32
    %36 = arith.extui %35 : i1 to i32
    %c0_i32_19 = arith.constant 0 : i32
    %37 = arith.cmpi ne, %36, %c0_i32_19 : i32
    scf.if %37 {
      %c0_20 = arith.constant 0 : index
      %c0_21 = arith.constant 0 : index
      %38 = vector.load %arg5[%c0_20, %c0_21] : memref<32x16xf32, #tpu.memory_space<vmem>>, vector<32x16xf32>
      %c0_22 = arith.constant 0 : index
      %c0_23 = arith.constant 0 : index
      %39 = vector.load %arg6[%c0_22, %c0_23] : memref<32x16xf32, #tpu.memory_space<vmem>>, vector<32x16xf32>
      %cst_24 = arith.constant 1.000000e-16 : f32
      %40 = vector.broadcast %cst_24 : f32 to vector<32x16xf32>
      %41 = arith.addf %40, %38 : vector<32x16xf32>
      %42 = arith.divf %39, %41 : vector<32x16xf32>
      %43 = tpu.iota {dimensions = array<i32: 0>} : vector<32x32xi32>
      %44 = tpu.iota {dimensions = array<i32: 1>} : vector<32x32xi32>
      %45 = arith.cmpi eq, %43, %44 : vector<32x32xi32>
      %46 = arith.extui %45 : vector<32x32xi1> to vector<32x32xi32>
      %47 = arith.sitofp %46 : vector<32x32xi32> to vector<32x32xf32>
      %c1_i32 = arith.constant 1 : i32
      %48 = vector.broadcast %c1_i32 : i32 to vector<32x32xi32>
      %49 = arith.addi %44, %48 : vector<32x32xi32>
      %50 = arith.cmpi eq, %43, %49 : vector<32x32xi32>
      %51 = arith.extui %50 : vector<32x32xi1> to vector<32x32xi32>
      %52 = arith.sitofp %51 : vector<32x32xi32> to vector<32x32xf32>
      %53 = arith.subf %47, %52 : vector<32x32xf32>
      %cst_25 = arith.constant dense<0.000000e+00> : vector<32x16xf32>
      %54 = tpu.matmul %53, %39, %cst_25 {dimension_numbers = #tpu.dot_dimension_numbers<[1], [0], [0], [1], [0, 0, 1, 1], [], []>} : vector<32x32xf32>, vector<32x16xf32>, vector<32x16xf32> -> vector<32x16xf32>
      %55 = vector.extract_strided_slice %39 {offsets = [31, 0], sizes = [1, 16], strides = [1, 1]} : vector<32x16xf32> to vector<1x16xf32>
      %56 = arith.mulf %42, %54 : vector<32x16xf32>
      %cst_26 = arith.constant dense<0.000000e+00> : vector<16xf32>
      %57 = vector.multi_reduction <add>, %56, %cst_26 [0] : vector<32x16xf32> to vector<16xf32>
      %58 = vector.shape_cast %57 : vector<16xf32> to vector<1x16xf32>
      %59 = arith.divf %58, %55 : vector<1x16xf32>
      %c0_27 = arith.constant 0 : index
      %c0_28 = arith.constant 0 : index
      %60 = vector.load %arg4[%c0_27, %c0_28] : memref<1x16xf32, #tpu.memory_space<vmem>>, vector<1x16xf32>
      tpu.vector_store %arg4[%c0_27, %c0_28], %59 {strides = array<i32>} : memref<1x16xf32, #tpu.memory_space<vmem>>, vector<1x16xf32>,
    } else {
    }
    return
  }
  func.func @transform_0(%arg0: i32, %arg1: i32) -> (i32, i32) {
    %c0_i32 = arith.constant 0 : i32
    return %arg0, %arg1 : i32, i32
  }
  func.func @transform_1(%arg0: i32, %arg1: i32) -> (i32, i32) {
    %c0_i32 = arith.constant 0 : i32
    return %arg0, %arg1 : i32, i32
  }
  func.func @transform_2(%arg0: i32, %arg1: i32) -> (i32, i32) {
    %c0_i32 = arith.constant 0 : i32
    %c0_i32_0 = arith.constant 0 : i32
    return %arg0, %c0_i32 : i32, i32
  }
}

</mosaic_0001>

<llo_original>
// kernel: tpu_custom_call.1
$region0: #{tpu_custom_call.1}
  #allocation0 [shape = 'u32[]', space=smem, size = 0x4, offset = 0x4, fixed_abs, tag = 'smem constant byte address 0x4 - core index']
  #allocation1 [shape = 'u32[144,128]{1,0:T(1,128)}', space=vmem, size = 0x12000, scoped, tag = 'internal scratch']
  #allocation2 [shape = 'f32[32,16]{1,0:T(8,128)}', space=vmem, size = 0x4000, scoped, tag = 'scratch operand']
  #allocation3 [shape = 'f32[32,16]{1,0:T(8,128)}', space=vmem, size = 0x4000, scoped, tag = 'scratch operand']
  %s0 = inlined_call_operand.hbm [shape: f32[16,128], index: 0, kind: input, shape index: {}]
  %s1 = inlined_call_operand.hbm [shape: f32[16,128], index: 1, kind: input, shape index: {}]
  %s2 = inlined_call_operand.hbm [shape: f32[1,16], index: 2, kind: output, shape index: {}]
  %s3 = sld [smem:[#allocation0]]
  $region34: #{tpu_custom_call.1} parent=0
    _
  %s5 = ssub.s32 1, %s3
  %s6 = scalar_select 0, %s5, %s3
  $region1: #{tpu_custom_call.1} parent=0
    #allocation4 [shape = 'u8[8192]{0}', space=vmem, size = 0x2000, scoped, tag = 'input window, operand 0, single buffered']
    #allocation5 [shape = 's32[1]{0}', space=sflag, size = 0x4, scoped, tag = 'scoped memory for tpu_custom_call.1']
    #allocation6 [shape = 's32[1]{0}', space=sflag, size = 0x4, scoped, tag = 'scoped memory for tpu_custom_call.1']
    #allocation7 [shape = 'u8[8192]{0}', space=vmem, size = 0x2000, scoped, tag = 'input window, operand 1, single buffered']
    #allocation8 [shape = 's32[1]{0}', space=sflag, size = 0x4, scoped, tag = 'scoped memory for tpu_custom_call.1']
    #allocation9 [shape = 'u8[512]{0}', space=vmem, size = 0x400, scoped, tag = 'output window, operand 0, single buffered']
    %7 = vsyncpa [#allocation5], 0
    %8 = vsyncpa [#allocation8], 0
    %9 = vsyncpa [#allocation6], 0
    // Predicated region
    $region2: #{tpu_custom_call.1} parent=1 // pred_check
      _
    $region3: #{tpu_custom_call.1} parent=1 // pred_check_branch
      %11 = sbr.rel (0) target = $region5
    $region4: #{tpu_custom_call.1} parent=1 // pred_region
      %s13 = ssub.s32 256, 256
      %14 = vsyncadd [#allocation5], %s13
      %s15 = sshll.u32 [#allocation4], 4
      %s16 = int_to_ptr.vmem [resolvable:$true] %s15
      %21 = dma.hbm_to_vmem [thread:$0]  %s0, 256, %s16, [#allocation5], 128, 128, 8
    $region5: #{tpu_custom_call.1} parent=1 // pred_fallthru
      _
    // Predicated region
    $region6: #{tpu_custom_call.1} parent=1 // pred_check
      _
    $region7: #{tpu_custom_call.1} parent=1 // pred_check_branch
      %23 = sbr.rel (0) target = $region9
    $region8: #{tpu_custom_call.1} parent=1 // pred_region
      %s25 = ssub.s32 256, 256
      %26 = vsyncadd [#allocation8], %s25
      %s27 = sshll.u32 [#allocation7], 4
      %s28 = int_to_ptr.vmem [resolvable:$true] %s27
      %33 = dma.hbm_to_vmem [thread:$0]  %s1, 256, %s28, [#allocation8], 128, 128, 8
    $region9: #{tpu_custom_call.1} parent=1 // pred_fallthru
      _
    // Predicated region
    $region10: #{tpu_custom_call.1} parent=1 // pred_check
      _
    $region11: #{tpu_custom_call.1} parent=1 // pred_check_branch
      %35 = sbr.rel (0) target = $region13
    $region12: #{tpu_custom_call.1} parent=1 // pred_region
      %36 = dma.done [#allocation5], 256
    $region13: #{tpu_custom_call.1} parent=1 // pred_fallthru
      _
    // Predicated region
    $region14: #{tpu_custom_call.1} parent=1 // pred_check
      _
    $region15: #{tpu_custom_call.1} parent=1 // pred_check_branch
      %38 = sbr.rel (0) target = $region17
    $region16: #{tpu_custom_call.1} parent=1 // pred_region
      %39 = dma.done [#allocation8], 256
    $region17: #{tpu_custom_call.1} parent=1 // pred_fallthru
      _
    %p40 = scmp.eq.s32.totalorder 0, 0
    // Predicated region
    $region18: #{tpu_custom_call.1} parent=1 // pred_check
      %p41 = pneg %p40
    $region19: #{tpu_custom_call.1} parent=1 // pred_check_branch
      %43 = sbr.rel (%p41) target = $region21
    $region20: #{tpu_custom_call.1} parent=1 // pred_region
      %vm44 = vcmask 130048
      %45 = vst.msk [vmem:[#allocation2] sm:$0xff] %vm44, 0.0
      %46 = vst.msk [vmem:[#allocation2 + $0x8] sm:$0xff] %vm44, 0.0
      %47 = vst.msk [vmem:[#allocation2 + $0x10] sm:$0xff] %vm44, 0.0
      %48 = vst.msk [vmem:[#allocation2 + $0x18] sm:$0xff] %vm44, 0.0
      %49 = vst.msk [vmem:[#allocation3] sm:$0xff] %vm44, 0.0
      %50 = vst.msk [vmem:[#allocation3 + $0x8] sm:$0xff] %vm44, 0.0
      %51 = vst.msk [vmem:[#allocation3 + $0x10] sm:$0xff] %vm44, 0.0
      %52 = vst.msk [vmem:[#allocation3 + $0x18] sm:$0xff] %vm44, 0.0
    $region21: #{tpu_custom_call.1} parent=1 // pred_fallthru
      _
    %v53 = vld [vmem:[#allocation4] sm:$0xff]
    %v54 = vld [vmem:[#allocation4 + $0x8] sm:$0xff]
    %v55 = vld [vmem:[#allocation7] sm:$0xff]
    %v56 = vld [vmem:[#allocation7 + $0x8] sm:$0xff]
    %v57 = vlaneseq
    %v58 = vshrl.u32 %v57, 7
    %v59 = vadd.s32 %v58, 8
    %v60 = vadd.s32 %v58, 16
    %v61 = vadd.s32 %v58, 24
    %vm62 = vcmp.lt.s32.totalorder %v58, 24
    %v63 = vsel %vm62, %v58, 24
    %vm64 = vcmp.lt.s32.totalorder %v59, 24
    %v65 = vsel %vm64, %v59, 24
    %vm66 = vcmp.lt.s32.totalorder %v60, 24
    %v67 = vsel %vm66, %v60, 24
    %vm68 = vcmp.lt.s32.totalorder %v61, 24
    %v69 = vsel %vm68, %v61, 24
    %v70 = vcvt.s32.f32 %v63
    %v71 = vcvt.s32.f32 %v65
    %v72 = vcvt.s32.f32 %v67
    %v73 = vcvt.s32.f32 %v69
    %v74 = vadd.f32 %v70, -23.0
    %v75 = vadd.f32 %v71, -23.0
    %v76 = vadd.f32 %v72, -23.0
    %v77 = vadd.f32 %v73, -23.0
    %v78 = vmul.f32 %v53, 24.0
    %v79 = vmul.f32 %v54, 24.0
    %v84 = vlaneseq
    %v85 = vshrl.u32 %v84, 7
    %v86 = vsub.s32 0, %v85
    %v87 = vrot.slane %v74, %v86
    %v88 = vlaneseq
    %v89 = vshrl.u32 %v88, 7
    %v90 = vsub.s32 1, %v89
    %v91 = vrot.slane %v74, %v90
    %v92 = vlaneseq
    %v93 = vshrl.u32 %v92, 7
    %v94 = vsub.s32 2, %v93
    %v95 = vrot.slane %v74, %v94
    %v96 = vlaneseq
    %v97 = vshrl.u32 %v96, 7
    %v98 = vsub.s32 3, %v97
    %v99 = vrot.slane %v74, %v98
    %v100 = vlaneseq
    %v101 = vshrl.u32 %v100, 7
    %v102 = vsub.s32 4, %v101
    %v103 = vrot.slane %v74, %v102
    %v104 = vlaneseq
    %v105 = vshrl.u32 %v104, 7
    %v106 = vsub.s32 5, %v105
    %v107 = vrot.slane %v74, %v106
    %v108 = vlaneseq
    %v109 = vshrl.u32 %v108, 7
    %v110 = vsub.s32 6, %v109
    %v111 = vrot.slane %v74, %v110
    %v112 = vlaneseq
    %v113 = vshrl.u32 %v112, 7
    %v114 = vsub.s32 7, %v113
    %v115 = vrot.slane %v74, %v114
    %v116 = vlaneseq
    %v117 = vshrl.u32 %v116, 7
    %v118 = vsub.s32 0, %v117
    %v119 = vrot.slane %v75, %v118
    %v120 = vlaneseq
    %v121 = vshrl.u32 %v120, 7
    %v122 = vsub.s32 1, %v121
    %v123 = vrot.slane %v75, %v122
    %v124 = vlaneseq
    %v125 = vshrl.u32 %v124, 7
    %v126 = vsub.s32 2, %v125
    %v127 = vrot.slane %v75, %v126
    %v128 = vlaneseq
    %v129 = vshrl.u32 %v128, 7
    %v130 = vsub.s32 3, %v129
    %v131 = vrot.slane %v75, %v130
    %v132 = vlaneseq
    %v133 = vshrl.u32 %v132, 7
    %v134 = vsub.s32 4, %v133
    %v135 = vrot.slane %v75, %v134
    %v136 = vlaneseq
    %v137 = vshrl.u32 %v136, 7
    %v138 = vsub.s32 5, %v137
    %v139 = vrot.slane %v75, %v138
    %v140 = vlaneseq
    %v141 = vshrl.u32 %v140, 7
    %v142 = vsub.s32 6, %v141
    %v143 = vrot.slane %v75, %v142
    %v144 = vlaneseq
    %v145 = vshrl.u32 %v144, 7
    %v146 = vsub.s32 7, %v145
    %v147 = vrot.slane %v75, %v146
    %v148 = vlaneseq
    %v149 = vshrl.u32 %v148, 7
    %v150 = vsub.s32 0, %v149
    %v151 = vrot.slane %v76, %v150
    %v152 = vlaneseq
    %v153 = vshrl.u32 %v152, 7
    %v154 = vsub.s32 1, %v153
    %v155 = vrot.slane %v76, %v154
    %v156 = vlaneseq
    %v157 = vshrl.u32 %v156, 7
    %v158 = vsub.s32 2, %v157
    %v159 = vrot.slane %v76, %v158
    %v160 = vlaneseq
    %v161 = vshrl.u32 %v160, 7
    %v162 = vsub.s32 3, %v161
    %v163 = vrot.slane %v76, %v162
    %v164 = vlaneseq
    %v165 = vshrl.u32 %v164, 7
    %v166 = vsub.s32 4, %v165
    %v167 = vrot.slane %v76, %v166
    %v168 = vlaneseq
    %v169 = vshrl.u32 %v168, 7
    %v170 = vsub.s32 5, %v169
    %v171 = vrot.slane %v76, %v170
    %v172 = vlaneseq
    %v173 = vshrl.u32 %v172, 7
    %v174 = vsub.s32 6, %v173
    %v175 = vrot.slane %v76, %v174
    %v176 = vlaneseq
    %v177 = vshrl.u32 %v176, 7
    %v178 = vsub.s32 7, %v177
    %v179 = vrot.slane %v76, %v178
    %v180 = vlaneseq
    %v181 = vshrl.u32 %v180, 7
    %v182 = vsub.s32 0, %v181
    %v183 = vrot.slane %v77, %v182
    %v184 = vlaneseq
    %v185 = vshrl.u32 %v184, 7
    %v186 = vsub.s32 1, %v185
    %v187 = vrot.slane %v77, %v186
    %v188 = vlaneseq
    %v189 = vshrl.u32 %v188, 7
    %v190 = vsub.s32 2, %v189
    %v191 = vrot.slane %v77, %v190
    %v192 = vlaneseq
    %v193 = vshrl.u32 %v192, 7
    %v194 = vsub.s32 3, %v193
    %v195 = vrot.slane %v77, %v194
    %v196 = vlaneseq
    %v197 = vshrl.u32 %v196, 7
    %v198 = vsub.s32 4, %v197
    %v199 = vrot.slane %v77, %v198
    %v200 = vlaneseq
    %v201 = vshrl.u32 %v200, 7
    %v202 = vsub.s32 5, %v201
    %v203 = vrot.slane %v77, %v202
    %v204 = vlaneseq
    %v205 = vshrl.u32 %v204, 7
    %v206 = vsub.s32 6, %v205
    %v207 = vrot.slane %v77, %v206
    %v208 = vlaneseq
    %v209 = vshrl.u32 %v208, 7
    %v210 = vsub.s32 7, %v209
    %v211 = vrot.slane %v77, %v210
    %v244 = vadd.f32 %v87, %v78
    %v245 = vadd.f32 %v87, %v79
    %v246 = vadd.f32 %v91, %v78
    %v247 = vadd.f32 %v91, %v79
    %v248 = vadd.f32 %v95, %v78
    %v249 = vadd.f32 %v95, %v79
    %v250 = vadd.f32 %v99, %v78
    %v251 = vadd.f32 %v99, %v79
    %v252 = vadd.f32 %v103, %v78
    %v253 = vadd.f32 %v103, %v79
    %v254 = vadd.f32 %v107, %v78
    %v255 = vadd.f32 %v107, %v79
    %v256 = vadd.f32 %v111, %v78
    %v257 = vadd.f32 %v111, %v79
    %v258 = vadd.f32 %v115, %v78
    %v259 = vadd.f32 %v115, %v79
    %v260 = vadd.f32 %v119, %v78
    %v261 = vadd.f32 %v119, %v79
    %v262 = vadd.f32 %v123, %v78
    %v263 = vadd.f32 %v123, %v79
    %v264 = vadd.f32 %v127, %v78
    %v265 = vadd.f32 %v127, %v79
    %v266 = vadd.f32 %v131, %v78
    %v267 = vadd.f32 %v131, %v79
    %v268 = vadd.f32 %v135, %v78
    %v269 = vadd.f32 %v135, %v79
    %v270 = vadd.f32 %v139, %v78
    %v271 = vadd.f32 %v139, %v79
    %v272 = vadd.f32 %v143, %v78
    %v273 = vadd.f32 %v143, %v79
    %v274 = vadd.f32 %v147, %v78
    %v275 = vadd.f32 %v147, %v79
    %v276 = vadd.f32 %v151, %v78
    %v277 = vadd.f32 %v151, %v79
    %v278 = vadd.f32 %v155, %v78
    %v279 = vadd.f32 %v155, %v79
    %v280 = vadd.f32 %v159, %v78
    %v281 = vadd.f32 %v159, %v79
    %v282 = vadd.f32 %v163, %v78
    %v283 = vadd.f32 %v163, %v79
    %v284 = vadd.f32 %v167, %v78
    %v285 = vadd.f32 %v167, %v79
    %v286 = vadd.f32 %v171, %v78
    %v287 = vadd.f32 %v171, %v79
    %v288 = vadd.f32 %v175, %v78
    %v289 = vadd.f32 %v175, %v79
    %v290 = vadd.f32 %v179, %v78
    %v291 = vadd.f32 %v179, %v79
    %v292 = vadd.f32 %v183, %v78
    %v293 = vadd.f32 %v183, %v79
    %v294 = vadd.f32 %v187, %v78
    %v295 = vadd.f32 %v187, %v79
    %v296 = vadd.f32 %v191, %v78
    %v297 = vadd.f32 %v191, %v79
    %v298 = vadd.f32 %v195, %v78
    %v299 = vadd.f32 %v195, %v79
    %v300 = vadd.f32 %v199, %v78
    %v301 = vadd.f32 %v199, %v79
    %v302 = vadd.f32 %v203, %v78
    %v303 = vadd.f32 %v203, %v79
    %v304 = vadd.f32 %v207, %v78
    %v305 = vadd.f32 %v207, %v79
    %v306 = vadd.f32 %v211, %v78
    %v307 = vadd.f32 %v211, %v79
    %v308 = vmax.f32 %v244, 0.0
    %v309 = vmax.f32 %v245, 0.0
    %v310 = vmax.f32 %v246, 0.0
    %v311 = vmax.f32 %v247, 0.0
    %v312 = vmax.f32 %v248, 0.0
    %v313 = vmax.f32 %v249, 0.0
    %v314 = vmax.f32 %v250, 0.0
    %v315 = vmax.f32 %v251, 0.0
    %v316 = vmax.f32 %v252, 0.0
    %v317 = vmax.f32 %v253, 0.0
    %v318 = vmax.f32 %v254, 0.0
    %v319 = vmax.f32 %v255, 0.0
    %v320 = vmax.f32 %v256, 0.0
    %v321 = vmax.f32 %v257, 0.0
    %v322 = vmax.f32 %v258, 0.0
    %v323 = vmax.f32 %v259, 0.0
    %v324 = vmax.f32 %v260, 0.0
    %v325 = vmax.f32 %v261, 0.0
    %v326 = vmax.f32 %v262, 0.0
    %v327 = vmax.f32 %v263, 0.0
    %v328 = vmax.f32 %v264, 0.0
    %v329 = vmax.f32 %v265, 0.0
    %v330 = vmax.f32 %v266, 0.0
    %v331 = vmax.f32 %v267, 0.0
    %v332 = vmax.f32 %v268, 0.0
    %v333 = vmax.f32 %v269, 0.0
    %v334 = vmax.f32 %v270, 0.0
    %v335 = vmax.f32 %v271, 0.0
    %v336 = vmax.f32 %v272, 0.0
    %v337 = vmax.f32 %v273, 0.0
    %v338 = vmax.f32 %v274, 0.0
    %v339 = vmax.f32 %v275, 0.0
    %v340 = vmax.f32 %v276, 0.0
    %v341 = vmax.f32 %v277, 0.0
    %v342 = vmax.f32 %v278, 0.0
    %v343 = vmax.f32 %v279, 0.0
    %v344 = vmax.f32 %v280, 0.0
    %v345 = vmax.f32 %v281, 0.0
    %v346 = vmax.f32 %v282, 0.0
    %v347 = vmax.f32 %v283, 0.0
    %v348 = vmax.f32 %v284, 0.0
    %v349 = vmax.f32 %v285, 0.0
    %v350 = vmax.f32 %v286, 0.0
    %v351 = vmax.f32 %v287, 0.0
    %v352 = vmax.f32 %v288, 0.0
    %v353 = vmax.f32 %v289, 0.0
    %v354 = vmax.f32 %v290, 0.0
    %v355 = vmax.f32 %v291, 0.0
    %v356 = vmax.f32 %v292, 0.0
    %v357 = vmax.f32 %v293, 0.0
    %v358 = vmax.f32 %v294, 0.0
    %v359 = vmax.f32 %v295, 0.0
    %v360 = vmax.f32 %v296, 0.0
    %v361 = vmax.f32 %v297, 0.0
    %v362 = vmax.f32 %v298, 0.0
    %v363 = vmax.f32 %v299, 0.0
    %v364 = vmax.f32 %v300, 0.0
    %v365 = vmax.f32 %v301, 0.0
    %v366 = vmax.f32 %v302, 0.0
    %v367 = vmax.f32 %v303, 0.0
    %v368 = vmax.f32 %v304, 0.0
    %v369 = vmax.f32 %v305, 0.0
    %v370 = vmax.f32 %v306, 0.0
    %v371 = vmax.f32 %v307, 0.0
    %v372 = vmin.f32 %v308, 1.0
    %v373 = vmin.f32 %v309, 1.0
    %v374 = vmin.f32 %v310, 1.0
    %v375 = vmin.f32 %v311, 1.0
    %v376 = vmin.f32 %v312, 1.0
    %v377 = vmin.f32 %v313, 1.0
    %v378 = vmin.f32 %v314, 1.0
    %v379 = vmin.f32 %v315, 1.0
    %v380 = vmin.f32 %v316, 1.0
    %v381 = vmin.f32 %v317, 1.0
    %v382 = vmin.f32 %v318, 1.0
    %v383 = vmin.f32 %v319, 1.0
    %v384 = vmin.f32 %v320, 1.0
    %v385 = vmin.f32 %v321, 1.0
    %v386 = vmin.f32 %v322, 1.0
    %v387 = vmin.f32 %v323, 1.0
    %v388 = vmin.f32 %v324, 1.0
    %v389 = vmin.f32 %v325, 1.0
    %v390 = vmin.f32 %v326, 1.0
    %v391 = vmin.f32 %v327, 1.0
    %v392 = vmin.f32 %v328, 1.0
    %v393 = vmin.f32 %v329, 1.0
    %v394 = vmin.f32 %v330, 1.0
    %v395 = vmin.f32 %v331, 1.0
    %v396 = vmin.f32 %v332, 1.0
    %v397 = vmin.f32 %v333, 1.0
    %v398 = vmin.f32 %v334, 1.0
    %v399 = vmin.f32 %v335, 1.0
    %v400 = vmin.f32 %v336, 1.0
    %v401 = vmin.f32 %v337, 1.0
    %v402 = vmin.f32 %v338, 1.0
    %v403 = vmin.f32 %v339, 1.0
    %v404 = vmin.f32 %v340, 1.0
    %v405 = vmin.f32 %v341, 1.0
    %v406 = vmin.f32 %v342, 1.0
    %v407 = vmin.f32 %v343, 1.0
    %v408 = vmin.f32 %v344, 1.0
    %v409 = vmin.f32 %v345, 1.0
    %v410 = vmin.f32 %v346, 1.0
    %v411 = vmin.f32 %v347, 1.0
    %v412 = vmin.f32 %v348, 1.0
    %v413 = vmin.f32 %v349, 1.0
    %v414 = vmin.f32 %v350, 1.0
    %v415 = vmin.f32 %v351, 1.0
    %v416 = vmin.f32 %v352, 1.0
    %v417 = vmin.f32 %v353, 1.0
    %v418 = vmin.f32 %v354, 1.0
    %v419 = vmin.f32 %v355, 1.0
    %v420 = vmin.f32 %v356, 1.0
    %v421 = vmin.f32 %v357, 1.0
    %v422 = vmin.f32 %v358, 1.0
    %v423 = vmin.f32 %v359, 1.0
    %v424 = vmin.f32 %v360, 1.0
    %v425 = vmin.f32 %v361, 1.0
    %v426 = vmin.f32 %v362, 1.0
    %v427 = vmin.f32 %v363, 1.0
    %v428 = vmin.f32 %v364, 1.0
    %v429 = vmin.f32 %v365, 1.0
    %v430 = vmin.f32 %v366, 1.0
    %v431 = vmin.f32 %v367, 1.0
    %v432 = vmin.f32 %v368, 1.0
    %v433 = vmin.f32 %v369, 1.0
    %v434 = vmin.f32 %v370, 1.0
    %v435 = vmin.f32 %v371, 1.0
    %v436 = vld [vmem:[#allocation2] sm:$0xff]
    %v437 = vld [vmem:[#allocation2 + $0x8] sm:$0xff]
    %v438 = vld [vmem:[#allocation2 + $0x10] sm:$0xff]
    %v439 = vld [vmem:[#allocation2 + $0x18] sm:$0xff]
    %440 = vadd.xlane.f32.xlu0 %v372
    %v441 = vpop.xlane.xlu0 %440
    %442 = vadd.xlane.f32.xlu0 %v373
    %v443 = vpop.xlane.xlu0 %442
    %444 = vadd.xlane.f32.xlu0 %v374
    %v445 = vpop.xlane.xlu0 %444
    %446 = vadd.xlane.f32.xlu0 %v375
    %v447 = vpop.xlane.xlu0 %446
    %448 = vadd.xlane.f32.xlu0 %v376
    %v449 = vpop.xlane.xlu0 %448
    %450 = vadd.xlane.f32.xlu0 %v377
    %v451 = vpop.xlane.xlu0 %450
    %452 = vadd.xlane.f32.xlu0 %v378
    %v453 = vpop.xlane.xlu0 %452
    %454 = vadd.xlane.f32.xlu0 %v379
    %v455 = vpop.xlane.xlu0 %454
    %456 = vadd.xlane.f32.xlu0 %v380
    %v457 = vpop.xlane.xlu0 %456
    %458 = vadd.xlane.f32.xlu0 %v381
    %v459 = vpop.xlane.xlu0 %458
    %460 = vadd.xlane.f32.xlu0 %v382
    %v461 = vpop.xlane.xlu0 %460
    %462 = vadd.xlane.f32.xlu0 %v383
    %v463 = vpop.xlane.xlu0 %462
    %464 = vadd.xlane.f32.xlu0 %v384
    %v465 = vpop.xlane.xlu0 %464
    %466 = vadd.xlane.f32.xlu0 %v385
    %v467 = vpop.xlane.xlu0 %466
    %468 = vadd.xlane.f32.xlu0 %v386
    %v469 = vpop.xlane.xlu0 %468
    %470 = vadd.xlane.f32.xlu0 %v387
    %v471 = vpop.xlane.xlu0 %470
    %472 = vadd.xlane.f32.xlu0 %v388
    %v473 = vpop.xlane.xlu0 %472
    %474 = vadd.xlane.f32.xlu0 %v389
    %v475 = vpop.xlane.xlu0 %474
    %476 = vadd.xlane.f32.xlu0 %v390
    %v477 = vpop.xlane.xlu0 %476
    %478 = vadd.xlane.f32.xlu0 %v391
    %v479 = vpop.xlane.xlu0 %478
    %480 = vadd.xlane.f32.xlu0 %v392
    %v481 = vpop.xlane.xlu0 %480
    %482 = vadd.xlane.f32.xlu0 %v393
    %v483 = vpop.xlane.xlu0 %482
    %484 = vadd.xlane.f32.xlu0 %v394
    %v485 = vpop.xlane.xlu0 %484
    %486 = vadd.xlane.f32.xlu0 %v395
    %v487 = vpop.xlane.xlu0 %486
    %488 = vadd.xlane.f32.xlu0 %v396
    %v489 = vpop.xlane.xlu0 %488
    %490 = vadd.xlane.f32.xlu0 %v397
    %v491 = vpop.xlane.xlu0 %490
    %492 = vadd.xlane.f32.xlu0 %v398
    %v493 = vpop.xlane.xlu0 %492
    %494 = vadd.xlane.f32.xlu0 %v399
    %v495 = vpop.xlane.xlu0 %494
    %496 = vadd.xlane.f32.xlu0 %v400
    %v497 = vpop.xlane.xlu0 %496
    %498 = vadd.xlane.f32.xlu0 %v401
    %v499 = vpop.xlane.xlu0 %498
    %500 = vadd.xlane.f32.xlu0 %v402
    %v501 = vpop.xlane.xlu0 %500
    %502 = vadd.xlane.f32.xlu0 %v403
    %v503 = vpop.xlane.xlu0 %502
    %504 = vadd.xlane.f32.xlu0 %v404
    %v505 = vpop.xlane.xlu0 %504
    %506 = vadd.xlane.f32.xlu0 %v405
    %v507 = vpop.xlane.xlu0 %506
    %508 = vadd.xlane.f32.xlu0 %v406
    %v509 = vpop.xlane.xlu0 %508
    %510 = vadd.xlane.f32.xlu0 %v407
    %v511 = vpop.xlane.xlu0 %510
    %512 = vadd.xlane.f32.xlu0 %v408
    %v513 = vpop.xlane.xlu0 %512
    %514 = vadd.xlane.f32.xlu0 %v409
    %v515 = vpop.xlane.xlu0 %514
    %516 = vadd.xlane.f32.xlu0 %v410
    %v517 = vpop.xlane.xlu0 %516
    %518 = vadd.xlane.f32.xlu0 %v411
    %v519 = vpop.xlane.xlu0 %518
    %520 = vadd.xlane.f32.xlu0 %v412
    %v521 = vpop.xlane.xlu0 %520
    %522 = vadd.xlane.f32.xlu0 %v413
    %v523 = vpop.xlane.xlu0 %522
    %524 = vadd.xlane.f32.xlu0 %v414
    %v525 = vpop.xlane.xlu0 %524
    %526 = vadd.xlane.f32.xlu0 %v415
    %v527 = vpop.xlane.xlu0 %526
    %528 = vadd.xlane.f32.xlu0 %v416
    %v529 = vpop.xlane.xlu0 %528
    %530 = vadd.xlane.f32.xlu0 %v417
    %v531 = vpop.xlane.xlu0 %530
    %532 = vadd.xlane.f32.xlu0 %v418
    %v533 = vpop.xlane.xlu0 %532
    %534 = vadd.xlane.f32.xlu0 %v419
    %v535 = vpop.xlane.xlu0 %534
    %536 = vadd.xlane.f32.xlu0 %v420
    %v537 = vpop.xlane.xlu0 %536
    %538 = vadd.xlane.f32.xlu0 %v421
    %v539 = vpop.xlane.xlu0 %538
    %540 = vadd.xlane.f32.xlu0 %v422
    %v541 = vpop.xlane.xlu0 %540
    %542 = vadd.xlane.f32.xlu0 %v423
    %v543 = vpop.xlane.xlu0 %542
    %544 = vadd.xlane.f32.xlu0 %v424
    %v545 = vpop.xlane.xlu0 %544
    %546 = vadd.xlane.f32.xlu0 %v425
    %v547 = vpop.xlane.xlu0 %546
    %548 = vadd.xlane.f32.xlu0 %v426
    %v549 = vpop.xlane.xlu0 %548
    %550 = vadd.xlane.f32.xlu0 %v427
    %v551 = vpop.xlane.xlu0 %550
    %552 = vadd.xlane.f32.xlu0 %v428
    %v553 = vpop.xlane.xlu0 %552
    %554 = vadd.xlane.f32.xlu0 %v429
    %v555 = vpop.xlane.xlu0 %554
    %556 = vadd.xlane.f32.xlu0 %v430
    %v557 = vpop.xlane.xlu0 %556
    %558 = vadd.xlane.f32.xlu0 %v431
    %v559 = vpop.xlane.xlu0 %558
    %560 = vadd.xlane.f32.xlu0 %v432
    %v561 = vpop.xlane.xlu0 %560
    %562 = vadd.xlane.f32.xlu0 %v433
    %v563 = vpop.xlane.xlu0 %562
    %564 = vadd.xlane.f32.xlu0 %v434
    %v565 = vpop.xlane.xlu0 %564
    %566 = vadd.xlane.f32.xlu0 %v435
    %v567 = vpop.xlane.xlu0 %566
    %v632 = vlaneseq
    %v633 = vand.u32 %v632, 127
    %v634 = vlaneseq
    %v635 = vshrl.u32 %v634, 7
    %v636 = vsub.s32 %v633, %v635
    %v637 = vrot.slane %v441, %v636
    %v638 = vadd.s32 %v633, 4294967288
    %v639 = vlaneseq
    %v640 = vshrl.u32 %v639, 7
    %v641 = vsub.s32 %v638, %v640
    %v642 = vrot.slane %v443, %v641
    %vm643 = vcmask 130112
    %v644 = vsel %vm643, %v642, %v637
    %v645 = vlaneseq
    %v646 = vshrl.u32 %v645, 7
    %v647 = vsub.s32 %v633, %v646
    %v648 = vrot.slane %v445, %v647
    %v649 = vlaneseq
    %v650 = vshrl.u32 %v649, 7
    %v651 = vsub.s32 %v638, %v650
    %v652 = vrot.slane %v447, %v651
    %v653 = vsel %vm643, %v652, %v648
    %v654 = vlaneseq
    %v655 = vshrl.u32 %v654, 7
    %v656 = vsub.s32 %v633, %v655
    %v657 = vrot.slane %v449, %v656
    %v658 = vlaneseq
    %v659 = vshrl.u32 %v658, 7
    %v660 = vsub.s32 %v638, %v659
    %v661 = vrot.slane %v451, %v660
    %v662 = vsel %vm643, %v661, %v657
    %v663 = vlaneseq
    %v664 = vshrl.u32 %v663, 7
    %v665 = vsub.s32 %v633, %v664
    %v666 = vrot.slane %v453, %v665
    %v667 = vlaneseq
    %v668 = vshrl.u32 %v667, 7
    %v669 = vsub.s32 %v638, %v668
    %v670 = vrot.slane %v455, %v669
    %v671 = vsel %vm643, %v670, %v666
    %v672 = vlaneseq
    %v673 = vshrl.u32 %v672, 7
    %v674 = vsub.s32 %v633, %v673
    %v675 = vrot.slane %v457, %v674
    %v676 = vlaneseq
    %v677 = vshrl.u32 %v676, 7
    %v678 = vsub.s32 %v638, %v677
    %v679 = vrot.slane %v459, %v678
    %v680 = vsel %vm643, %v679, %v675
    %v681 = vlaneseq
    %v682 = vshrl.u32 %v681, 7
    %v683 = vsub.s32 %v633, %v682
    %v684 = vrot.slane %v461, %v683
    %v685 = vlaneseq
    %v686 = vshrl.u32 %v685, 7
    %v687 = vsub.s32 %v638, %v686
    %v688 = vrot.slane %v463, %v687
    %v689 = vsel %vm643, %v688, %v684
    %v690 = vlaneseq
    %v691 = vshrl.u32 %v690, 7
    %v692 = vsub.s32 %v633, %v691
    %v693 = vrot.slane %v465, %v692
    %v694 = vlaneseq
    %v695 = vshrl.u32 %v694, 7
    %v696 = vsub.s32 %v638, %v695
    %v697 = vrot.slane %v467, %v696
    %v698 = vsel %vm643, %v697, %v693
    %v699 = vlaneseq
    %v700 = vshrl.u32 %v699, 7
    %v701 = vsub.s32 %v633, %v700
    %v702 = vrot.slane %v469, %v701
    %v703 = vlaneseq
    %v704 = vshrl.u32 %v703, 7
    %v705 = vsub.s32 %v638, %v704
    %v706 = vrot.slane %v471, %v705
    %v707 = vsel %vm643, %v706, %v702
    %v708 = vlaneseq
    %v709 = vshrl.u32 %v708, 7
    %v710 = vsub.s32 %v633, %v709
    %v711 = vrot.slane %v473, %v710
    %v712 = vlaneseq
    %v713 = vshrl.u32 %v712, 7
    %v714 = vsub.s32 %v638, %v713
    %v715 = vrot.slane %v475, %v714
    %v716 = vsel %vm643, %v715, %v711
    %v717 = vlaneseq
    %v718 = vshrl.u32 %v717, 7
    %v719 = vsub.s32 %v633, %v718
    %v720 = vrot.slane %v477, %v719
    %v721 = vlaneseq
    %v722 = vshrl.u32 %v721, 7
    %v723 = vsub.s32 %v638, %v722
    %v724 = vrot.slane %v479, %v723
    %v725 = vsel %vm643, %v724, %v720
    %v726 = vlaneseq
    %v727 = vshrl.u32 %v726, 7
    %v728 = vsub.s32 %v633, %v727
    %v729 = vrot.slane %v481, %v728
    %v730 = vlaneseq
    %v731 = vshrl.u32 %v730, 7
    %v732 = vsub.s32 %v638, %v731
    %v733 = vrot.slane %v483, %v732
    %v734 = vsel %vm643, %v733, %v729
    %v735 = vlaneseq
    %v736 = vshrl.u32 %v735, 7
    %v737 = vsub.s32 %v633, %v736
    %v738 = vrot.slane %v485, %v737
    %v739 = vlaneseq
    %v740 = vshrl.u32 %v739, 7
    %v741 = vsub.s32 %v638, %v740
    %v742 = vrot.slane %v487, %v741
    %v743 = vsel %vm643, %v742, %v738
    %v744 = vlaneseq
    %v745 = vshrl.u32 %v744, 7
    %v746 = vsub.s32 %v633, %v745
    %v747 = vrot.slane %v489, %v746
    %v748 = vlaneseq
    %v749 = vshrl.u32 %v748, 7
    %v750 = vsub.s32 %v638, %v749
    %v751 = vrot.slane %v491, %v750
    %v752 = vsel %vm643, %v751, %v747
    %v753 = vlaneseq
    %v754 = vshrl.u32 %v753, 7
    %v755 = vsub.s32 %v633, %v754
    %v756 = vrot.slane %v493, %v755
    %v757 = vlaneseq
    %v758 = vshrl.u32 %v757, 7
    %v759 = vsub.s32 %v638, %v758
    %v760 = vrot.slane %v495, %v759
    %v761 = vsel %vm643, %v760, %v756
    %v762 = vlaneseq
    %v763 = vshrl.u32 %v762, 7
    %v764 = vsub.s32 %v633, %v763
    %v765 = vrot.slane %v497, %v764
    %v766 = vlaneseq
    %v767 = vshrl.u32 %v766, 7
    %v768 = vsub.s32 %v638, %v767
    %v769 = vrot.slane %v499, %v768
    %v770 = vsel %vm643, %v769, %v765
    %v771 = vlaneseq
    %v772 = vshrl.u32 %v771, 7
    %v773 = vsub.s32 %v633, %v772
    %v774 = vrot.slane %v501, %v773
    %v775 = vlaneseq
    %v776 = vshrl.u32 %v775, 7
    %v777 = vsub.s32 %v638, %v776
    %v778 = vrot.slane %v503, %v777
    %v779 = vsel %vm643, %v778, %v774
    %v780 = vlaneseq
    %v781 = vshrl.u32 %v780, 7
    %v782 = vsub.s32 %v633, %v781
    %v783 = vrot.slane %v505, %v782
    %v784 = vlaneseq
    %v785 = vshrl.u32 %v784, 7
    %v786 = vsub.s32 %v638, %v785
    %v787 = vrot.slane %v507, %v786
    %v788 = vsel %vm643, %v787, %v783
    %v789 = vlaneseq
    %v790 = vshrl.u32 %v789, 7
    %v791 = vsub.s32 %v633, %v790
    %v792 = vrot.slane %v509, %v791
    %v793 = vlaneseq
    %v794 = vshrl.u32 %v793, 7
    %v795 = vsub.s32 %v638, %v794
    %v796 = vrot.slane %v511, %v795
    %v797 = vsel %vm643, %v796, %v792
    %v798 = vlaneseq
    %v799 = vshrl.u32 %v798, 7
    %v800 = vsub.s32 %v633, %v799
    %v801 = vrot.slane %v513, %v800
    %v802 = vlaneseq
    %v803 = vshrl.u32 %v802, 7
    %v804 = vsub.s32 %v638, %v803
    %v805 = vrot.slane %v515, %v804
    %v806 = vsel %vm643, %v805, %v801
    %v807 = vlaneseq
    %v808 = vshrl.u32 %v807, 7
    %v809 = vsub.s32 %v633, %v808
    %v810 = vrot.slane %v517, %v809
    %v811 = vlaneseq
    %v812 = vshrl.u32 %v811, 7
    %v813 = vsub.s32 %v638, %v812
    %v814 = vrot.slane %v519, %v813
    %v815 = vsel %vm643, %v814, %v810
    %v816 = vlaneseq
    %v817 = vshrl.u32 %v816, 7
    %v818 = vsub.s32 %v633, %v817
    %v819 = vrot.slane %v521, %v818
    %v820 = vlaneseq
    %v821 = vshrl.u32 %v820, 7
    %v822 = vsub.s32 %v638, %v821
    %v823 = vrot.slane %v523, %v822
    %v824 = vsel %vm643, %v823, %v819
    %v825 = vlaneseq
    %v826 = vshrl.u32 %v825, 7
    %v827 = vsub.s32 %v633, %v826
    %v828 = vrot.slane %v525, %v827
    %v829 = vlaneseq
    %v830 = vshrl.u32 %v829, 7
    %v831 = vsub.s32 %v638, %v830
    %v832 = vrot.slane %v527, %v831
    %v833 = vsel %vm643, %v832, %v828
    %v834 = vlaneseq
    %v835 = vshrl.u32 %v834, 7
    %v836 = vsub.s32 %v633, %v835
    %v837 = vrot.slane %v529, %v836
    %v838 = vlaneseq
    %v839 = vshrl.u32 %v838, 7
    %v840 = vsub.s32 %v638, %v839
    %v841 = vrot.slane %v531, %v840
    %v842 = vsel %vm643, %v841, %v837
    %v843 = vlaneseq
    %v844 = vshrl.u32 %v843, 7
    %v845 = vsub.s32 %v633, %v844
    %v846 = vrot.slane %v533, %v845
    %v847 = vlaneseq
    %v848 = vshrl.u32 %v847, 7
    %v849 = vsub.s32 %v638, %v848
    %v850 = vrot.slane %v535, %v849
    %v851 = vsel %vm643, %v850, %v846
    %v852 = vlaneseq
    %v853 = vshrl.u32 %v852, 7
    %v854 = vsub.s32 %v633, %v853
    %v855 = vrot.slane %v537, %v854
    %v856 = vlaneseq
    %v857 = vshrl.u32 %v856, 7
    %v858 = vsub.s32 %v638, %v857
    %v859 = vrot.slane %v539, %v858
    %v860 = vsel %vm643, %v859, %v855
    %v861 = vlaneseq
    %v862 = vshrl.u32 %v861, 7
    %v863 = vsub.s32 %v633, %v862
    %v864 = vrot.slane %v541, %v863
    %v865 = vlaneseq
    %v866 = vshrl.u32 %v865, 7
    %v867 = vsub.s32 %v638, %v866
    %v868 = vrot.slane %v543, %v867
    %v869 = vsel %vm643, %v868, %v864
    %v870 = vlaneseq
    %v871 = vshrl.u32 %v870, 7
    %v872 = vsub.s32 %v633, %v871
    %v873 = vrot.slane %v545, %v872
    %v874 = vlaneseq
    %v875 = vshrl.u32 %v874, 7
    %v876 = vsub.s32 %v638, %v875
    %v877 = vrot.slane %v547, %v876
    %v878 = vsel %vm643, %v877, %v873
    %v879 = vlaneseq
    %v880 = vshrl.u32 %v879, 7
    %v881 = vsub.s32 %v633, %v880
    %v882 = vrot.slane %v549, %v881
    %v883 = vlaneseq
    %v884 = vshrl.u32 %v883, 7
    %v885 = vsub.s32 %v638, %v884
    %v886 = vrot.slane %v551, %v885
    %v887 = vsel %vm643, %v886, %v882
    %v888 = vlaneseq
    %v889 = vshrl.u32 %v888, 7
    %v890 = vsub.s32 %v633, %v889
    %v891 = vrot.slane %v553, %v890
    %v892 = vlaneseq
    %v893 = vshrl.u32 %v892, 7
    %v894 = vsub.s32 %v638, %v893
    %v895 = vrot.slane %v555, %v894
    %v896 = vsel %vm643, %v895, %v891
    %v897 = vlaneseq
    %v898 = vshrl.u32 %v897, 7
    %v899 = vsub.s32 %v633, %v898
    %v900 = vrot.slane %v557, %v899
    %v901 = vlaneseq
    %v902 = vshrl.u32 %v901, 7
    %v903 = vsub.s32 %v638, %v902
    %v904 = vrot.slane %v559, %v903
    %v905 = vsel %vm643, %v904, %v900
    %v906 = vlaneseq
    %v907 = vshrl.u32 %v906, 7
    %v908 = vsub.s32 %v633, %v907
    %v909 = vrot.slane %v561, %v908
    %v910 = vlaneseq
    %v911 = vshrl.u32 %v910, 7
    %v912 = vsub.s32 %v638, %v911
    %v913 = vrot.slane %v563, %v912
    %v914 = vsel %vm643, %v913, %v909
    %v915 = vlaneseq
    %v916 = vshrl.u32 %v915, 7
    %v917 = vsub.s32 %v633, %v916
    %v918 = vrot.slane %v565, %v917
    %v919 = vlaneseq
    %v920 = vshrl.u32 %v919, 7
    %v921 = vsub.s32 %v638, %v920
    %v922 = vrot.slane %v567, %v921
    %v923 = vsel %vm643, %v922, %v918
    %vm924 = vcmask 1041409
    %v925 = vsel %vm924, %v653, %v644
    %vm926 = vcmask 1042434
    %v927 = vsel %vm926, %v662, %v925
    %vm928 = vcmask 1043459
    %v929 = vsel %vm928, %v671, %v927
    %vm930 = vcmask 1044484
    %v931 = vsel %vm930, %v680, %v929
    %vm932 = vcmask 1045509
    %v933 = vsel %vm932, %v689, %v931
    %vm934 = vcmask 1046534
    %v935 = vsel %vm934, %v698, %v933
    %vm936 = vcmask 1047559
    %v937 = vsel %vm936, %v707, %v935
    %v938 = vsel %vm924, %v725, %v716
    %v939 = vsel %vm926, %v734, %v938
    %v940 = vsel %vm928, %v743, %v939
    %v941 = vsel %vm930, %v752, %v940
    %v942 = vsel %vm932, %v761, %v941
    %v943 = vsel %vm934, %v770, %v942
    %v944 = vsel %vm936, %v779, %v943
    %v945 = vsel %vm924, %v797, %v788
    %v946 = vsel %vm926, %v806, %v945
    %v947 = vsel %vm928, %v815, %v946
    %v948 = vsel %vm930, %v824, %v947
    %v949 = vsel %vm932, %v833, %v948
    %v950 = vsel %vm934, %v842, %v949
    %v951 = vsel %vm936, %v851, %v950
    %v952 = vsel %vm924, %v869, %v860
    %v953 = vsel %vm926, %v878, %v952
    %v954 = vsel %vm928, %v887, %v953
    %v955 = vsel %vm930, %v896, %v954
    %v956 = vsel %vm932, %v905, %v955
    %v957 = vsel %vm934, %v914, %v956
    %v958 = vsel %vm936, %v923, %v957
    %v963 = vadd.f32 %v436, %v937
    %v964 = vadd.f32 %v437, %v944
    %v965 = vadd.f32 %v438, %v951
    %v966 = vadd.f32 %v439, %v958
    %vm967 = vcmask 130048
    %968 = vst.msk [vmem:[#allocation2] sm:$0xff] %vm967, %v963
    %969 = vst.msk [vmem:[#allocation2 + $0x8] sm:$0xff] %vm967, %v964
    %970 = vst.msk [vmem:[#allocation2 + $0x10] sm:$0xff] %vm967, %v965
    %971 = vst.msk [vmem:[#allocation2 + $0x18] sm:$0xff] %vm967, %v966
    %v972 = vld [vmem:[#allocation3] sm:$0xff]
    %v973 = vld [vmem:[#allocation3 + $0x8] sm:$0xff]
    %v974 = vld [vmem:[#allocation3 + $0x10] sm:$0xff]
    %v975 = vld [vmem:[#allocation3 + $0x18] sm:$0xff]
    %v976 = vmul.f32 %v372, %v55
    %v977 = vmul.f32 %v373, %v56
    %v978 = vmul.f32 %v374, %v55
    %v979 = vmul.f32 %v375, %v56
    %v980 = vmul.f32 %v376, %v55
    %v981 = vmul.f32 %v377, %v56
    %v982 = vmul.f32 %v378, %v55
    %v983 = vmul.f32 %v379, %v56
    %v984 = vmul.f32 %v380, %v55
    %v985 = vmul.f32 %v381, %v56
    %v986 = vmul.f32 %v382, %v55
    %v987 = vmul.f32 %v383, %v56
    %v988 = vmul.f32 %v384, %v55
    %v989 = vmul.f32 %v385, %v56
    %v990 = vmul.f32 %v386, %v55
    %v991 = vmul.f32 %v387, %v56
    %v992 = vmul.f32 %v388, %v55
    %v993 = vmul.f32 %v389, %v56
    %v994 = vmul.f32 %v390, %v55
    %v995 = vmul.f32 %v391, %v56
    %v996 = vmul.f32 %v392, %v55
    %v997 = vmul.f32 %v393, %v56
    %v998 = vmul.f32 %v394, %v55
    %v999 = vmul.f32 %v395, %v56
    %v1000 = vmul.f32 %v396, %v55
    %v1001 = vmul.f32 %v397, %v56
    %v1002 = vmul.f32 %v398, %v55
    %v1003 = vmul.f32 %v399, %v56
    %v1004 = vmul.f32 %v400, %v55
    %v1005 = vmul.f32 %v401, %v56
    %v1006 = vmul.f32 %v402, %v55
    %v1007 = vmul.f32 %v403, %v56
    %v1008 = vmul.f32 %v404, %v55
    %v1009 = vmul.f32 %v405, %v56
    %v1010 = vmul.f32 %v406, %v55
    %v1011 = vmul.f32 %v407, %v56
    %v1012 = vmul.f32 %v408, %v55
    %v1013 = vmul.f32 %v409, %v56
    %v1014 = vmul.f32 %v410, %v55
    %v1015 = vmul.f32 %v411, %v56
    %v1016 = vmul.f32 %v412, %v55
    %v1017 = vmul.f32 %v413, %v56
    %v1018 = vmul.f32 %v414, %v55
    %v1019 = vmul.f32 %v415, %v56
    %v1020 = vmul.f32 %v416, %v55
    %v1021 = vmul.f32 %v417, %v56
    %v1022 = vmul.f32 %v418, %v55
    %v1023 = vmul.f32 %v419, %v56
    %v1024 = vmul.f32 %v420, %v55
    %v1025 = vmul.f32 %v421, %v56
    %v1026 = vmul.f32 %v422, %v55
    %v1027 = vmul.f32 %v423, %v56
    %v1028 = vmul.f32 %v424, %v55
    %v1029 = vmul.f32 %v425, %v56
    %v1030 = vmul.f32 %v426, %v55
    %v1031 = vmul.f32 %v427, %v56
    %v1032 = vmul.f32 %v428, %v55
    %v1033 = vmul.f32 %v429, %v56
    %v1034 = vmul.f32 %v430, %v55
    %v1035 = vmul.f32 %v431, %v56
    %v1036 = vmul.f32 %v432, %v55
    %v1037 = vmul.f32 %v433, %v56
    %v1038 = vmul.f32 %v434, %v55
    %v1039 = vmul.f32 %v435, %v56
    %1040 = vadd.xlane.f32.xlu0 %v976
    %v1041 = vpop.xlane.xlu0 %1040
    %1042 = vadd.xlane.f32.xlu0 %v977
    %v1043 = vpop.xlane.xlu0 %1042
    %1044 = vadd.xlane.f32.xlu0 %v978
    %v1045 = vpop.xlane.xlu0 %1044
    %1046 = vadd.xlane.f32.xlu0 %v979
    %v1047 = vpop.xlane.xlu0 %1046
    %1048 = vadd.xlane.f32.xlu0 %v980
    %v1049 = vpop.xlane.xlu0 %1048
    %1050 = vadd.xlane.f32.xlu0 %v981
    %v1051 = vpop.xlane.xlu0 %1050
    %1052 = vadd.xlane.f32.xlu0 %v982
    %v1053 = vpop.xlane.xlu0 %1052
    %1054 = vadd.xlane.f32.xlu0 %v983
    %v1055 = vpop.xlane.xlu0 %1054
    %1056 = vadd.xlane.f32.xlu0 %v984
    %v1057 = vpop.xlane.xlu0 %1056
    %1058 = vadd.xlane.f32.xlu0 %v985
    %v1059 = vpop.xlane.xlu0 %1058
    %1060 = vadd.xlane.f32.xlu0 %v986
    %v1061 = vpop.xlane.xlu0 %1060
    %1062 = vadd.xlane.f32.xlu0 %v987
    %v1063 = vpop.xlane.xlu0 %1062
    %1064 = vadd.xlane.f32.xlu0 %v988
    %v1065 = vpop.xlane.xlu0 %1064
    %1066 = vadd.xlane.f32.xlu0 %v989
    %v1067 = vpop.xlane.xlu0 %1066
    %1068 = vadd.xlane.f32.xlu0 %v990
    %v1069 = vpop.xlane.xlu0 %1068
    %1070 = vadd.xlane.f32.xlu0 %v991
    %v1071 = vpop.xlane.xlu0 %1070
    %1072 = vadd.xlane.f32.xlu0 %v992
    %v1073 = vpop.xlane.xlu0 %1072
    %1074 = vadd.xlane.f32.xlu0 %v993
    %v1075 = vpop.xlane.xlu0 %1074
    %1076 = vadd.xlane.f32.xlu0 %v994
    %v1077 = vpop.xlane.xlu0 %1076
    %1078 = vadd.xlane.f32.xlu0 %v995
    %v1079 = vpop.xlane.xlu0 %1078
    %1080 = vadd.xlane.f32.xlu0 %v996
    %v1081 = vpop.xlane.xlu0 %1080
    %1082 = vadd.xlane.f32.xlu0 %v997
    %v1083 = vpop.xlane.xlu0 %1082
    %1084 = vadd.xlane.f32.xlu0 %v998
    %v1085 = vpop.xlane.xlu0 %1084
    %1086 = vadd.xlane.f32.xlu0 %v999
    %v1087 = vpop.xlane.xlu0 %1086
    %1088 = vadd.xlane.f32.xlu0 %v1000
    %v1089 = vpop.xlane.xlu0 %1088
    %1090 = vadd.xlane.f32.xlu0 %v1001
    %v1091 = vpop.xlane.xlu0 %1090
    %1092 = vadd.xlane.f32.xlu0 %v1002
    %v1093 = vpop.xlane.xlu0 %1092
    %1094 = vadd.xlane.f32.xlu0 %v1003
    %v1095 = vpop.xlane.xlu0 %1094
    %1096 = vadd.xlane.f32.xlu0 %v1004
    %v1097 = vpop.xlane.xlu0 %1096
    %1098 = vadd.xlane.f32.xlu0 %v1005
    %v1099 = vpop.xlane.xlu0 %1098
    %1100 = vadd.xlane.f32.xlu0 %v1006
    %v1101 = vpop.xlane.xlu0 %1100
    %1102 = vadd.xlane.f32.xlu0 %v1007
    %v1103 = vpop.xlane.xlu0 %1102
    %1104 = vadd.xlane.f32.xlu0 %v1008
    %v1105 = vpop.xlane.xlu0 %1104
    %1106 = vadd.xlane.f32.xlu0 %v1009
    %v1107 = vpop.xlane.xlu0 %1106
    %1108 = vadd.xlane.f32.xlu0 %v1010
    %v1109 = vpop.xlane.xlu0 %1108
    %1110 = vadd.xlane.f32.xlu0 %v1011
    %v1111 = vpop.xlane.xlu0 %1110
    %1112 = vadd.xlane.f32.xlu0 %v1012
    %v1113 = vpop.xlane.xlu0 %1112
    %1114 = vadd.xlane.f32.xlu0 %v1013
    %v1115 = vpop.xlane.xlu0 %1114
    %1116 = vadd.xlane.f32.xlu0 %v1014
    %v1117 = vpop.xlane.xlu0 %1116
    %1118 = vadd.xlane.f32.xlu0 %v1015
    %v1119 = vpop.xlane.xlu0 %1118
    %1120 = vadd.xlane.f32.xlu0 %v1016
    %v1121 = vpop.xlane.xlu0 %1120
    %1122 = vadd.xlane.f32.xlu0 %v1017
    %v1123 = vpop.xlane.xlu0 %1122
    %1124 = vadd.xlane.f32.xlu0 %v1018
    %v1125 = vpop.xlane.xlu0 %1124
    %1126 = vadd.xlane.f32.xlu0 %v1019
    %v1127 = vpop.xlane.xlu0 %1126
    %1128 = vadd.xlane.f32.xlu0 %v1020
    %v1129 = vpop.xlane.xlu0 %1128
    %1130 = vadd.xlane.f32.xlu0 %v1021
    %v1131 = vpop.xlane.xlu0 %1130
    %1132 = vadd.xlane.f32.xlu0 %v1022
    %v1133 = vpop.xlane.xlu0 %1132
    %1134 = vadd.xlane.f32.xlu0 %v1023
    %v1135 = vpop.xlane.xlu0 %1134
    %1136 = vadd.xlane.f32.xlu0 %v1024
    %v1137 = vpop.xlane.xlu0 %1136
    %1138 = vadd.xlane.f32.xlu0 %v1025
    %v1139 = vpop.xlane.xlu0 %1138
    %1140 = vadd.xlane.f32.xlu0 %v1026
    %v1141 = vpop.xlane.xlu0 %1140
    %1142 = vadd.xlane.f32.xlu0 %v1027
    %v1143 = vpop.xlane.xlu0 %1142
    %1144 = vadd.xlane.f32.xlu0 %v1028
    %v1145 = vpop.xlane.xlu0 %1144
    %1146 = vadd.xlane.f32.xlu0 %v1029
    %v1147 = vpop.xlane.xlu0 %1146
    %1148 = vadd.xlane.f32.xlu0 %v1030
    %v1149 = vpop.xlane.xlu0 %1148
    %1150 = vadd.xlane.f32.xlu0 %v1031
    %v1151 = vpop.xlane.xlu0 %1150
    %1152 = vadd.xlane.f32.xlu0 %v1032
    %v1153 = vpop.xlane.xlu0 %1152
    %1154 = vadd.xlane.f32.xlu0 %v1033
    %v1155 = vpop.xlane.xlu0 %1154
    %1156 = vadd.xlane.f32.xlu0 %v1034
    %v1157 = vpop.xlane.xlu0 %1156
    %1158 = vadd.xlane.f32.xlu0 %v1035
    %v1159 = vpop.xlane.xlu0 %1158
    %1160 = vadd.xlane.f32.xlu0 %v1036
    %v1161 = vpop.xlane.xlu0 %1160
    %1162 = vadd.xlane.f32.xlu0 %v1037
    %v1163 = vpop.xlane.xlu0 %1162
    %1164 = vadd.xlane.f32.xlu0 %v1038
    %v1165 = vpop.xlane.xlu0 %1164
    %1166 = vadd.xlane.f32.xlu0 %v1039
    %v1167 = vpop.xlane.xlu0 %1166
    %v1232 = vlaneseq
    %v1233 = vshrl.u32 %v1232, 7
    %v1234 = vsub.s32 %v633, %v1233
    %v1235 = vrot.slane %v1041, %v1234
    %v1236 = vlaneseq
    %v1237 = vshrl.u32 %v1236, 7
    %v1238 = vsub.s32 %v638, %v1237
    %v1239 = vrot.slane %v1043, %v1238
    %v1240 = vsel %vm643, %v1239, %v1235
    %v1241 = vlaneseq
    %v1242 = vshrl.u32 %v1241, 7
    %v1243 = vsub.s32 %v633, %v1242
    %v1244 = vrot.slane %v1045, %v1243
    %v1245 = vlaneseq
    %v1246 = vshrl.u32 %v1245, 7
    %v1247 = vsub.s32 %v638, %v1246
    %v1248 = vrot.slane %v1047, %v1247
    %v1249 = vsel %vm643, %v1248, %v1244
    %v1250 = vlaneseq
    %v1251 = vshrl.u32 %v1250, 7
    %v1252 = vsub.s32 %v633, %v1251
    %v1253 = vrot.slane %v1049, %v1252
    %v1254 = vlaneseq
    %v1255 = vshrl.u32 %v1254, 7
    %v1256 = vsub.s32 %v638, %v1255
    %v1257 = vrot.slane %v1051, %v1256
    %v1258 = vsel %vm643, %v1257, %v1253
    %v1259 = vlaneseq
    %v1260 = vshrl.u32 %v1259, 7
    %v1261 = vsub.s32 %v633, %v1260
    %v1262 = vrot.slane %v1053, %v1261
    %v1263 = vlaneseq
    %v1264 = vshrl.u32 %v1263, 7
    %v1265 = vsub.s32 %v638, %v1264
    %v1266 = vrot.slane %v1055, %v1265
    %v1267 = vsel %vm643, %v1266, %v1262
    %v1268 = vlaneseq
    %v1269 = vshrl.u32 %v1268, 7
    %v1270 = vsub.s32 %v633, %v1269
    %v1271 = vrot.slane %v1057, %v1270
    %v1272 = vlaneseq
    %v1273 = vshrl.u32 %v1272, 7
    %v1274 = vsub.s32 %v638, %v1273
    %v1275 = vrot.slane %v1059, %v1274
    %v1276 = vsel %vm643, %v1275, %v1271
    %v1277 = vlaneseq
    %v1278 = vshrl.u32 %v1277, 7
    %v1279 = vsub.s32 %v633, %v1278
    %v1280 = vrot.slane %v1061, %v1279
    %v1281 = vlaneseq
    %v1282 = vshrl.u32 %v1281, 7
    %v1283 = vsub.s32 %v638, %v1282
    %v1284 = vrot.slane %v1063, %v1283
    %v1285 = vsel %vm643, %v1284, %v1280
    %v1286 = vlaneseq
    %v1287 = vshrl.u32 %v1286, 7
    %v1288 = vsub.s32 %v633, %v1287
    %v1289 = vrot.slane %v1065, %v1288
    %v1290 = vlaneseq
    %v1291 = vshrl.u32 %v1290, 7
    %v1292 = vsub.s32 %v638, %v1291
    %v1293 = vrot.slane %v1067, %v1292
    %v1294 = vsel %vm643, %v1293, %v1289
    %v1295 = vlaneseq
    %v1296 = vshrl.u32 %v1295, 7
    %v1297 = vsub.s32 %v633, %v1296
    %v1298 = vrot.slane %v1069, %v1297
    %v1299 = vlaneseq
    %v1300 = vshrl.u32 %v1299, 7
    %v1301 = vsub.s32 %v638, %v1300
    %v1302 = vrot.slane %v1071, %v1301
    %v1303 = vsel %vm643, %v1302, %v1298
    %v1304 = vlaneseq
    %v1305 = vshrl.u32 %v1304, 7
    %v1306 = vsub.s32 %v633, %v1305
    %v1307 = vrot.slane %v1073, %v1306
    %v1308 = vlaneseq
    %v1309 = vshrl.u32 %v1308, 7
    %v1310 = vsub.s32 %v638, %v1309
    %v1311 = vrot.slane %v1075, %v1310
    %v1312 = vsel %vm643, %v1311, %v1307
    %v1313 = vlaneseq
    %v1314 = vshrl.u32 %v1313, 7
    %v1315 = vsub.s32 %v633, %v1314
    %v1316 = vrot.slane %v1077, %v1315
    %v1317 = vlaneseq
    %v1318 = vshrl.u32 %v1317, 7
    %v1319 = vsub.s32 %v638, %v1318
    %v1320 = vrot.slane %v1079, %v1319
    %v1321 = vsel %vm643, %v1320, %v1316
    %v1322 = vlaneseq
    %v1323 = vshrl.u32 %v1322, 7
    %v1324 = vsub.s32 %v633, %v1323
    %v1325 = vrot.slane %v1081, %v1324
    %v1326 = vlaneseq
    %v1327 = vshrl.u32 %v1326, 7
    %v1328 = vsub.s32 %v638, %v1327
    %v1329 = vrot.slane %v1083, %v1328
    %v1330 = vsel %vm643, %v1329, %v1325
    %v1331 = vlaneseq
    %v1332 = vshrl.u32 %v1331, 7
    %v1333 = vsub.s32 %v633, %v1332
    %v1334 = vrot.slane %v1085, %v1333
    %v1335 = vlaneseq
    %v1336 = vshrl.u32 %v1335, 7
    %v1337 = vsub.s32 %v638, %v1336
    %v1338 = vrot.slane %v1087, %v1337
    %v1339 = vsel %vm643, %v1338, %v1334
    %v1340 = vlaneseq
    %v1341 = vshrl.u32 %v1340, 7
    %v1342 = vsub.s32 %v633, %v1341
    %v1343 = vrot.slane %v1089, %v1342
    %v1344 = vlaneseq
    %v1345 = vshrl.u32 %v1344, 7
    %v1346 = vsub.s32 %v638, %v1345
    %v1347 = vrot.slane %v1091, %v1346
    %v1348 = vsel %vm643, %v1347, %v1343
    %v1349 = vlaneseq
    %v1350 = vshrl.u32 %v1349, 7
    %v1351 = vsub.s32 %v633, %v1350
    %v1352 = vrot.slane %v1093, %v1351
    %v1353 = vlaneseq
    %v1354 = vshrl.u32 %v1353, 7
    %v1355 = vsub.s32 %v638, %v1354
    %v1356 = vrot.slane %v1095, %v1355
    %v1357 = vsel %vm643, %v1356, %v1352
    %v1358 = vlaneseq
    %v1359 = vshrl.u32 %v1358, 7
    %v1360 = vsub.s32 %v633, %v1359
    %v1361 = vrot.slane %v1097, %v1360
    %v1362 = vlaneseq
    %v1363 = vshrl.u32 %v1362, 7
    %v1364 = vsub.s32 %v638, %v1363
    %v1365 = vrot.slane %v1099, %v1364
    %v1366 = vsel %vm643, %v1365, %v1361
    %v1367 = vlaneseq
    %v1368 = vshrl.u32 %v1367, 7
    %v1369 = vsub.s32 %v633, %v1368
    %v1370 = vrot.slane %v1101, %v1369
    %v1371 = vlaneseq
    %v1372 = vshrl.u32 %v1371, 7
    %v1373 = vsub.s32 %v638, %v1372
    %v1374 = vrot.slane %v1103, %v1373
    %v1375 = vsel %vm643, %v1374, %v1370
    %v1376 = vlaneseq
    %v1377 = vshrl.u32 %v1376, 7
    %v1378 = vsub.s32 %v633, %v1377
    %v1379 = vrot.slane %v1105, %v1378
    %v1380 = vlaneseq
    %v1381 = vshrl.u32 %v1380, 7
    %v1382 = vsub.s32 %v638, %v1381
    %v1383 = vrot.slane %v1107, %v1382
    %v1384 = vsel %vm643, %v1383, %v1379
    %v1385 = vlaneseq
    %v1386 = vshrl.u32 %v1385, 7
    %v1387 = vsub.s32 %v633, %v1386
    %v1388 = vrot.slane %v1109, %v1387
    %v1389 = vlaneseq
    %v1390 = vshrl.u32 %v1389, 7
    %v1391 = vsub.s32 %v638, %v1390
    %v1392 = vrot.slane %v1111, %v1391
    %v1393 = vsel %vm643, %v1392, %v1388
    %v1394 = vlaneseq
    %v1395 = vshrl.u32 %v1394, 7
    %v1396 = vsub.s32 %v633, %v1395
    %v1397 = vrot.slane %v1113, %v1396
    %v1398 = vlaneseq
    %v1399 = vshrl.u32 %v1398, 7
    %v1400 = vsub.s32 %v638, %v1399
    %v1401 = vrot.slane %v1115, %v1400
    %v1402 = vsel %vm643, %v1401, %v1397
    %v1403 = vlaneseq
    %v1404 = vshrl.u32 %v1403, 7
    %v1405 = vsub.s32 %v633, %v1404
    %v1406 = vrot.slane %v1117, %v1405
    %v1407 = vlaneseq
    %v1408 = vshrl.u32 %v1407, 7
    %v1409 = vsub.s32 %v638, %v1408
    %v1410 = vrot.slane %v1119, %v1409
    %v1411 = vsel %vm643, %v1410, %v1406
    %v1412 = vlaneseq
    %v1413 = vshrl.u32 %v1412, 7
    %v1414 = vsub.s32 %v633, %v1413
    %v1415 = vrot.slane %v1121, %v1414
    %v1416 = vlaneseq
    %v1417 = vshrl.u32 %v1416, 7
    %v1418 = vsub.s32 %v638, %v1417
    %v1419 = vrot.slane %v1123, %v1418
    %v1420 = vsel %vm643, %v1419, %v1415
    %v1421 = vlaneseq
    %v1422 = vshrl.u32 %v1421, 7
    %v1423 = vsub.s32 %v633, %v1422
    %v1424 = vrot.slane %v1125, %v1423
    %v1425 = vlaneseq
    %v1426 = vshrl.u32 %v1425, 7
    %v1427 = vsub.s32 %v638, %v1426
    %v1428 = vrot.slane %v1127, %v1427
    %v1429 = vsel %vm643, %v1428, %v1424
    %v1430 = vlaneseq
    %v1431 = vshrl.u32 %v1430, 7
    %v1432 = vsub.s32 %v633, %v1431
    %v1433 = vrot.slane %v1129, %v1432
    %v1434 = vlaneseq
    %v1435 = vshrl.u32 %v1434, 7
    %v1436 = vsub.s32 %v638, %v1435
    %v1437 = vrot.slane %v1131, %v1436
    %v1438 = vsel %vm643, %v1437, %v1433
    %v1439 = vlaneseq
    %v1440 = vshrl.u32 %v1439, 7
    %v1441 = vsub.s32 %v633, %v1440
    %v1442 = vrot.slane %v1133, %v1441
    %v1443 = vlaneseq
    %v1444 = vshrl.u32 %v1443, 7
    %v1445 = vsub.s32 %v638, %v1444
    %v1446 = vrot.slane %v1135, %v1445
    %v1447 = vsel %vm643, %v1446, %v1442
    %v1448 = vlaneseq
    %v1449 = vshrl.u32 %v1448, 7
    %v1450 = vsub.s32 %v633, %v1449
    %v1451 = vrot.slane %v1137, %v1450
    %v1452 = vlaneseq
    %v1453 = vshrl.u32 %v1452, 7
    %v1454 = vsub.s32 %v638, %v1453
    %v1455 = vrot.slane %v1139, %v1454
    %v1456 = vsel %vm643, %v1455, %v1451
    %v1457 = vlaneseq
    %v1458 = vshrl.u32 %v1457, 7
    %v1459 = vsub.s32 %v633, %v1458
    %v1460 = vrot.slane %v1141, %v1459
    %v1461 = vlaneseq
    %v1462 = vshrl.u32 %v1461, 7
    %v1463 = vsub.s32 %v638, %v1462
    %v1464 = vrot.slane %v1143, %v1463
    %v1465 = vsel %vm643, %v1464, %v1460
    %v1466 = vlaneseq
    %v1467 = vshrl.u32 %v1466, 7
    %v1468 = vsub.s32 %v633, %v1467
    %v1469 = vrot.slane %v1145, %v1468
    %v1470 = vlaneseq
    %v1471 = vshrl.u32 %v1470, 7
    %v1472 = vsub.s32 %v638, %v1471
    %v1473 = vrot.slane %v1147, %v1472
    %v1474 = vsel %vm643, %v1473, %v1469
    %v1475 = vlaneseq
    %v1476 = vshrl.u32 %v1475, 7
    %v1477 = vsub.s32 %v633, %v1476
    %v1478 = vrot.slane %v1149, %v1477
    %v1479 = vlaneseq
    %v1480 = vshrl.u32 %v1479, 7
    %v1481 = vsub.s32 %v638, %v1480
    %v1482 = vrot.slane %v1151, %v1481
    %v1483 = vsel %vm643, %v1482, %v1478
    %v1484 = vlaneseq
    %v1485 = vshrl.u32 %v1484, 7
    %v1486 = vsub.s32 %v633, %v1485
    %v1487 = vrot.slane %v1153, %v1486
    %v1488 = vlaneseq
    %v1489 = vshrl.u32 %v1488, 7
    %v1490 = vsub.s32 %v638, %v1489
    %v1491 = vrot.slane %v1155, %v1490
    %v1492 = vsel %vm643, %v1491, %v1487
    %v1493 = vlaneseq
    %v1494 = vshrl.u32 %v1493, 7
    %v1495 = vsub.s32 %v633, %v1494
    %v1496 = vrot.slane %v1157, %v1495
    %v1497 = vlaneseq
    %v1498 = vshrl.u32 %v1497, 7
    %v1499 = vsub.s32 %v638, %v1498
    %v1500 = vrot.slane %v1159, %v1499
    %v1501 = vsel %vm643, %v1500, %v1496
    %v1502 = vlaneseq
    %v1503 = vshrl.u32 %v1502, 7
    %v1504 = vsub.s32 %v633, %v1503
    %v1505 = vrot.slane %v1161, %v1504
    %v1506 = vlaneseq
    %v1507 = vshrl.u32 %v1506, 7
    %v1508 = vsub.s32 %v638, %v1507
    %v1509 = vrot.slane %v1163, %v1508
    %v1510 = vsel %vm643, %v1509, %v1505
    %v1511 = vlaneseq
    %v1512 = vshrl.u32 %v1511, 7
    %v1513 = vsub.s32 %v633, %v1512
    %v1514 = vrot.slane %v1165, %v1513
    %v1515 = vlaneseq
    %v1516 = vshrl.u32 %v1515, 7
    %v1517 = vsub.s32 %v638, %v1516
    %v1518 = vrot.slane %v1167, %v1517
    %v1519 = vsel %vm643, %v1518, %v1514
    %v1520 = vsel %vm924, %v1249, %v1240
    %v1521 = vsel %vm926, %v1258, %v1520
    %v1522 = vsel %vm928, %v1267, %v1521
    %v1523 = vsel %vm930, %v1276, %v1522
    %v1524 = vsel %vm932, %v1285, %v1523
    %v1525 = vsel %vm934, %v1294, %v1524
    %v1526 = vsel %vm936, %v1303, %v1525
    %v1527 = vsel %vm924, %v1321, %v1312
    %v1528 = vsel %vm926, %v1330, %v1527
    %v1529 = vsel %vm928, %v1339, %v1528
    %v1530 = vsel %vm930, %v1348, %v1529
    %v1531 = vsel %vm932, %v1357, %v1530
    %v1532 = vsel %vm934, %v1366, %v1531
    %v1533 = vsel %vm936, %v1375, %v1532
    %v1534 = vsel %vm924, %v1393, %v1384
    %v1535 = vsel %vm926, %v1402, %v1534
    %v1536 = vsel %vm928, %v1411, %v1535
    %v1537 = vsel %vm930, %v1420, %v1536
    %v1538 = vsel %vm932, %v1429, %v1537
    %v1539 = vsel %vm934, %v1438, %v1538
    %v1540 = vsel %vm936, %v1447, %v1539
    %v1541 = vsel %vm924, %v1465, %v1456
    %v1542 = vsel %vm926, %v1474, %v1541
    %v1543 = vsel %vm928, %v1483, %v1542
    %v1544 = vsel %vm930, %v1492, %v1543
    %v1545 = vsel %vm932, %v1501, %v1544
    %v1546 = vsel %vm934, %v1510, %v1545
    %v1547 = vsel %vm936, %v1519, %v1546
    %v1552 = vadd.f32 %v972, %v1526
    %v1553 = vadd.f32 %v973, %v1533
    %v1554 = vadd.f32 %v974, %v1540
    %v1555 = vadd.f32 %v975, %v1547
    %1556 = vst.msk [vmem:[#allocation3] sm:$0xff] %vm967, %v1552
    %1557 = vst.msk [vmem:[#allocation3 + $0x8] sm:$0xff] %vm967, %v1553
    %1558 = vst.msk [vmem:[#allocation3 + $0x10] sm:$0xff] %vm967, %v1554
    %1559 = vst.msk [vmem:[#allocation3 + $0x18] sm:$0xff] %vm967, %v1555
    // Predicated region
    $region22: #{tpu_custom_call.1} parent=1 // pred_check
      %p1560 = pneg %p40
    $region23: #{tpu_custom_call.1} parent=1 // pred_check_branch
      %1562 = sbr.rel (%p1560) target = $region25
    $region24: #{tpu_custom_call.1} parent=1 // pred_region
      %v1563 = vld [vmem:[#allocation2] sm:$0xff]
      %v1564 = vld [vmem:[#allocation2 + $0x8] sm:$0xff]
      %v1565 = vld [vmem:[#allocation2 + $0x10] sm:$0xff]
      %v1566 = vld [vmem:[#allocation2 + $0x18] sm:$0xff]
      %v1567 = vld [vmem:[#allocation3] sm:$0xff]
      %v1568 = vld [vmem:[#allocation3 + $0x8] sm:$0xff]
      %v1569 = vld [vmem:[#allocation3 + $0x10] sm:$0xff]
      %v1570 = vld [vmem:[#allocation3 + $0x18] sm:$0xff]
      %v1571 = vadd.f32 %v1563, 1e-16
      %v1572 = vadd.f32 %v1564, 1e-16
      %v1573 = vadd.f32 %v1565, 1e-16
      %v1574 = vadd.f32 %v1566, 1e-16
      %v1575 = vrcp.pop %v1571
      %v1576 = vmul.f32 %v1567, %v1575
      %v1577 = vrcp.pop %v1572
      %v1578 = vmul.f32 %v1568, %v1577
      %v1579 = vrcp.pop %v1573
      %v1580 = vmul.f32 %v1569, %v1579
      %v1581 = vrcp.pop %v1574
      %v1582 = vmul.f32 %v1570, %v1581
      %vm1583 = vcmp.eq.s32.totalorder %v58, %v633
      %vm1584 = vcmp.eq.s32.totalorder %v59, %v633
      %vm1585 = vcmp.eq.s32.totalorder %v60, %v633
      %vm1586 = vcmp.eq.s32.totalorder %v61, %v633
      %v1587 = vsel %vm1583, 1, 0
      %v1588 = vsel %vm1584, 1, 0
      %v1589 = vsel %vm1585, 1, 0
      %v1590 = vsel %vm1586, 1, 0
      %v1591 = vcvt.s32.f32 %v1587
      %v1592 = vcvt.s32.f32 %v1588
      %v1593 = vcvt.s32.f32 %v1589
      %v1594 = vcvt.s32.f32 %v1590
      %v1595 = vadd.s32 %v633, 1
      %vm1596 = vcmp.eq.s32.totalorder %v58, %v1595
      %vm1597 = vcmp.eq.s32.totalorder %v59, %v1595
      %vm1598 = vcmp.eq.s32.totalorder %v60, %v1595
      %vm1599 = vcmp.eq.s32.totalorder %v61, %v1595
      %v1600 = vsel %vm1596, 1, 0
      %v1601 = vsel %vm1597, 1, 0
      %v1602 = vsel %vm1598, 1, 0
      %v1603 = vsel %vm1599, 1, 0
      %v1604 = vcvt.s32.f32 %v1600
      %v1605 = vcvt.s32.f32 %v1601
      %v1606 = vcvt.s32.f32 %v1602
      %v1607 = vcvt.s32.f32 %v1603
      %v1608 = vsub.f32 %v1591, %v1604
      %v1609 = vsub.f32 %v1592, %v1605
      %v1610 = vsub.f32 %v1593, %v1606
      %v1611 = vsub.f32 %v1594, %v1607
      %vm1612 = vcmask 261120
      %v1614 = vsel %vm1612, %v1608, 0
      %v1617 = vsel %vm1612, %v1609, 0
      %v1620 = vsel %vm1612, %v1610, 0
      %v1623 = vsel %vm1612, %v1611, 0
      %1625 = vmatprep.subr.mxu0 0.0
      %1626 = vmatpush1.msra.mxu0 %v1567
      %1627 = vmatprep.subr.mxu0 0.0
      %1628 = vmatpush1.msra.mxu0 %v1568
      %1629 = vmatprep.subr.mxu0 0.0
      %1630 = vmatpush1.msra.mxu0 %v1569
      %1631 = vmatprep.subr.mxu0 0.0
      %1632 = vmatpush1.msra.mxu0 %v1570
      %1633 = vmatprep.subr.mxu0 0.0
      %1634 = vmatpush1.msra.mxu0 0.0
      %1635 = vmatprep.subr.mxu0 0.0
      %1636 = vmatpush1.msra.mxu0 0.0
      %1637 = vmatprep.subr.mxu0 0.0
      %1638 = vmatpush1.msra.mxu0 0.0
      %1639 = vmatprep.subr.mxu0 0.0
      %1640 = vmatpush1.msra.mxu0 0.0
      %1641 = vmatprep.subr.mxu0 0.0
      %1642 = vmatpush1.msra.mxu0 0.0
      %1643 = vmatprep.subr.mxu0 0.0
      %1644 = vmatpush1.msra.mxu0 0.0
      %1645 = vmatprep.subr.mxu0 0.0
      %1646 = vmatpush1.msra.mxu0 0.0
      %1647 = vmatprep.subr.mxu0 0.0
      %1648 = vmatpush1.msra.mxu0 0.0
      %1649 = vmatprep.subr.mxu0 0.0
      %1650 = vmatpush1.msra.mxu0 0.0
      %1651 = vmatprep.subr.mxu0 0.0
      %1652 = vmatpush1.msra.mxu0 0.0
      %1653 = vmatprep.subr.mxu0 0.0
      %1654 = vmatpush1.msra.mxu0 0.0
      %1655 = vmatprep.subr.mxu0 0.0
      %1656 = vmatpush1.msra.mxu0 0.0
      %1657 = vmatprep.subr.mxu0 0.0
      %1658 = vmatpush1.msra.mxu0 0.0
      %1659 = vmatprep.subr.mxu0 0.0
      %1660 = vmatpush1.msra.mxu0 0.0
      %1661 = vmatprep.subr.mxu0 0.0
      %1662 = vmatpush1.msra.mxu0 0.0
      %1663 = vmatprep.subr.mxu0 0.0
      %1664 = vmatpush1.msra.mxu0 0.0
      %1665 = vmatprep.subr.mxu0 0.0
      %1666 = vmatpush1.msra.mxu0 0.0
      %1667 = vmatprep.subr.mxu0 0.0
      %1668 = vmatpush1.msra.mxu0 0.0
      %1669 = vmatprep.subr.mxu0 0.0
      %1670 = vmatpush1.msra.mxu0 0.0
      %1671 = vmatprep.subr.mxu0 0.0
      %1672 = vmatpush1.msra.mxu0 0.0
      %1673 = vmatprep.subr.mxu0 0.0
      %1674 = vmatpush1.msra.mxu0 0.0
      %1675 = vmatprep.subr.mxu0 0.0
      %1676 = vmatpush1.msra.mxu0 0.0
      %1677 = vmatprep.subr.mxu0 0.0
      %1678 = vmatpush1.msra.mxu0 0.0
      %1679 = vmatprep.subr.mxu0 0.0
      %1680 = vmatpush1.msra.mxu0 0.0
      %1681 = vmatprep.subr.mxu0 0.0
      %1682 = vmatpush1.msra.mxu0 0.0
      %1683 = vmatprep.subr.mxu0 0.0
      %1684 = vmatpush1.msra.mxu0 0.0
      %1685 = vmatprep.subr.mxu0 0.0
      %1686 = vmatpush1.msra.mxu0 0.0
      %1687 = vmatprep.subr.mxu0 0.0
      %1688 = vmatpush1.msra.mxu0 0.0
      %1689 = vmatprep.mubr.f32.mxu0 0.0
      %1690 = vmatmul.mubr.f32.gmra.mrb[0].mxu0 %v1614
      %v1691 = vpop.f32.mrb[0].mxu0
      %v1692 = vadd.f32 0.0, %v1691
      %v1693 = vpop.f32.mrb[0].mxu0
      %1694 = vmatprep.mubr.f32.mxu0 0.0
      %1695 = vmatmul.mubr.f32.gmra.mrb[0].mxu0 %v1617
      %v1696 = vpop.f32.mrb[0].mxu0
      %v1697 = vadd.f32 0.0, %v1696
      %v1698 = vpop.f32.mrb[0].mxu0
      %1699 = vmatprep.mubr.f32.mxu0 0.0
      %1700 = vmatmul.mubr.f32.gmra.mrb[0].mxu0 %v1620
      %v1701 = vpop.f32.mrb[0].mxu0
      %v1702 = vadd.f32 0.0, %v1701
      %v1703 = vpop.f32.mrb[0].mxu0
      %1704 = vmatprep.mubr.f32.mxu0 0.0
      %1705 = vmatmul.mubr.f32.gmra.mrb[0].mxu0 %v1623
      %v1706 = vpop.f32.mrb[0].mxu0
      %v1707 = vadd.f32 0.0, %v1706
      %v1708 = vpop.f32.mrb[0].mxu0
      %1709 = vdwg.mxu0
      %v1710 = vmul.f32 %v1576, %v1692
      %v1711 = vmul.f32 %v1578, %v1697
      %v1712 = vmul.f32 %v1580, %v1702
      %v1713 = vmul.f32 %v1582, %v1707
      %v1714 = vsel %vm967, %v1710, 0.0
      %v1715 = vsel %vm967, %v1711, 0.0
      %v1716 = vadd.f32 %v1714, %v1715
      %v1717 = vsel %vm967, %v1712, 0.0
      %v1718 = vadd.f32 %v1716, %v1717
      %v1719 = vsel %vm967, %v1713, 0.0
      %v1720 = vadd.f32 %v1718, %v1719
      %v1721 = vrot.slane %v1720, 4
      %v1722 = vadd.f32 %v1720, %v1721
      %v1723 = vrot.slane %v1722, 2
      %v1724 = vadd.f32 %v1722, %v1723
      %v1725 = vrot.slane %v1724, 1
      %v1726 = vadd.f32 %v1724, %v1725
      %v1727 = vrcp.pop %v1570
      %v1728 = vmul.f32 %v1726, %v1727
      %vm1729 = vcmask 130055
      %1730 = vst.msk [vmem:[#allocation9 - $0x7] sm:$0x80] %vm1729, %v1728
    $region25: #{tpu_custom_call.1} parent=1 // pred_fallthru
      _
    // Predicated region
    $region26: #{tpu_custom_call.1} parent=1 // pred_check
      _
    $region27: #{tpu_custom_call.1} parent=1 // pred_check_branch
      %1732 = sbr.rel (0) target = $region29
    $region28: #{tpu_custom_call.1} parent=1 // pred_region
      %s1734 = ssub.s32 16, 16
      %1735 = vsyncadd [#allocation6], %s1734
      %s1737 = sshll.u32 [#allocation9], 4
      %s1738 = int_to_ptr.vmem [resolvable:$true] %s1737
      %1740 = dma.vmem_to_hbm [thread:$0]  %s1738, 16, %s2, [#allocation6]
    $region29: #{tpu_custom_call.1} parent=1 // pred_fallthru
      _
    // Predicated region
    $region30: #{tpu_custom_call.1} parent=1 // pred_check
      _
    $region31: #{tpu_custom_call.1} parent=1 // pred_check_branch
      %1742 = sbr.rel (0) target = $region33
    $region32: #{tpu_custom_call.1} parent=1 // pred_region
      %1743 = dma.done [#allocation6], 16
    $region33: #{tpu_custom_call.1} parent=1 // pred_fallthru
      _
    %1744 = vsyncpa [#allocation5], 1
    %1745 = vsyncpa [#allocation8], 1
    %1746 = vsyncpa [#allocation6], 1

</llo_original>
